<compile_context>
chip_gen: v5e
topology: v5e:2x2
jax: 0.10.0
libtpu: 0.0.40
codegen_flags: <defaults>
</compile_context>

<pallas_src>
import math

import jax
import jax.numpy as jnp
from jax import lax
from jax.experimental import pallas as pl
from jax.experimental.pallas import tpu as pltpu

KSIZE = 9
PAD = (KSIZE - 1) // 2  # 4


# ----------------------------------------------------------------------------
# PSF construction (tiny glue math, plain JAX in the wrapper)
# ----------------------------------------------------------------------------
def make_psf(sigma_x, sigma_y, sigma_z, spacing):
    """JAX port of Blurring_Model.make_psf (full 3-D PSF, reference only)."""
    xk = jnp.arange(KSIZE, dtype=jnp.float32)
    X, Y, Z = jnp.meshgrid(xk, xk, xk, indexing="ij")
    m = (KSIZE - 1) / 2.0
    sx = sigma_x / spacing[0]
    sy = sigma_y / spacing[1]
    sz = sigma_z / spacing[2]
    norm = jnp.sqrt(jnp.float32(2.0 * math.pi)) ** 3 * sx * sy * sz
    f = (1.0 / norm) * jnp.exp(
        -((X - m) ** 2 / sx**2 + (Y - m) ** 2 / sy**2 + (Z - m) ** 2 / sz**2) / 2.0
    )
    return f / jnp.sum(f)  # (9, 9, 9); axis 0 -> D, axis 1 -> H, axis 2 -> W


def make_psf_1d(sigma, spacing_i):
    """Normalized 1-D Gaussian taps (9,).  Outer product over axes == 3-D PSF."""
    xk = jnp.arange(KSIZE, dtype=jnp.float32)
    m = (KSIZE - 1) / 2.0
    s = sigma / spacing_i
    g = jnp.exp(-((xk - m) ** 2) / (2.0 * s**2))
    return g / jnp.sum(g)


def corr_matrix(n, taps):
    """Banded (n, n) matrix R with R[i, j] = taps[i - j + PAD].

    y = x @ R computes the 'same'-padded cross-correlation of x's last axis
    with `taps` (out-of-range taps masked == zero padding).
    """
    i = jnp.arange(n)[:, None]
    j = jnp.arange(n)[None, :]
    d = i - j + PAD
    valid = (d >= 0) & (d < KSIZE)
    return jnp.where(valid, taps[jnp.clip(d, 0, KSIZE - 1)], 0.0).astype(jnp.float32)


# ----------------------------------------------------------------------------
# Pallas kernel: one batch block of volumes per grid step, two MXU matmuls
# ----------------------------------------------------------------------------
def _blur_kernel(x_ref, awh_ref, bd_ref, o_ref):
    """x_ref:(R,HW)  awh_ref:(HW,HW)  bd_ref:(R,R)  o_ref:(R,HW), all f32."""
    # Blur along W and H in one fused MXU matmul (A_WH = kron(R_H, R_W)).
    y = jnp.dot(
        x_ref[...],
        awh_ref[...],
        preferred_element_type=jnp.float32,
        precision=lax.Precision.HIGHEST,
    )
    # Blur along D (block-diagonal left operator keeps the lane-dense layout).
    o_ref[...] = jnp.dot(
        bd_ref[...],
        y,
        preferred_element_type=jnp.float32,
        precision=lax.Precision.HIGHEST,
    ).astype(o_ref.dtype)


def blurring_model_forward(
    x, sigma_x, sigma_y, sigma_z, spacing, *, max_block_bytes=8 << 20
):
    """Equivalent of Blurring_Model.forward: depthwise 3-D Gaussian 'same' blur.

    x: (N, C, D, H, W) float32.  The same PSF is applied to every (N, C)
    volume (matches F.conv3d with a [1,1,9,9,9] kernel and groups=C).
    """
    N, C, D, H, W = x.shape
    NC = N * C
    HW = H * W

    # 1-D taps: meshgrid axis 0 (sigma_x) -> D, axis 1 (sigma_y) -> H,
    # axis 2 (sigma_z) -> W, matching the PyTorch module / F.conv3d OIDHW.
    taps_d = make_psf_1d(sigma_x, spacing[0])
    taps_h = make_psf_1d(sigma_y, spacing[1])
    taps_w = make_psf_1d(sigma_z, spacing[2])

    r_w = corr_matrix(W, taps_w)          # (W, W)
    r_h = corr_matrix(H, taps_h)          # (H, H)
    a_wh = jnp.kron(r_h, r_w)             # (HW, HW): fused H+W blur operator
    l_d = corr_matrix(D, taps_d).T        # (D, D):  left-multiply D blur

    # Pick the largest divisor `bb` of NC whose (in + out, double-buffered)
    # block comfortably fits VMEM; bb == NC -> a single grid step.
    vol_bytes = D * HW * 4
    bb = 1
    for cand in range(NC, 0, -1):
        if NC % cand == 0 and cand * vol_bytes * 4 <= max_block_bytes:
            bb = cand
            break
    rows = bb * D                          # rows per grid block
    # TODO(synk): if bb < NC and bb*D is not a multiple of 8, pad the batch
    # axis; demo shapes (D=16) always satisfy the (8,128) block constraint.

    bd = jnp.kron(jnp.eye(bb, dtype=jnp.float32), l_d)   # (rows, rows)

    xr = x.reshape(NC * D, HW).astype(jnp.float32)

    out = pl.pallas_call(
        _blur_kernel,
        out_shape=jax.ShapeDtypeStruct((NC * D, HW), jnp.float32),
        grid=(NC // bb,),
        in_specs=[
            pl.BlockSpec((rows, HW), lambda i: (i, 0)),   # bb volumes, lane-dense
            pl.BlockSpec((HW, HW), lambda i: (0, 0)),     # A_WH (resident)
            pl.BlockSpec((rows, rows), lambda i: (0, 0)), # BD   (resident)
        ],
        out_specs=pl.BlockSpec((rows, HW), lambda i: (i, 0)),
        compiler_params=pltpu.CompilerParams(
            dimension_semantics=("parallel",),            # megacore on v7x
        ),
    )(xr, a_wh, bd)

    return out.reshape(N, C, D, H, W).astype(x.dtype)


# ----------------------------------------------------------------------------
# Pure-JAX reference (full 3-D PSF, lax conv) for correctness checking
# ----------------------------------------------------------------------------
def _reference_forward(x, sigma_x, sigma_y, sigma_z, spacing):
    psf = make_psf(sigma_x, sigma_y, sigma_z, spacing)
    C = x.shape[1]
    w = jnp.broadcast_to(psf[None, None], (C, 1, KSIZE, KSIZE, KSIZE))
    return lax.conv_general_dilated(
        x,
        w,
        window_strides=(1, 1, 1),
        padding=[(PAD, PAD)] * 3,
        dimension_numbers=("NCDHW", "OIDHW", "NCDHW"),
        feature_group_count=C,
        precision=lax.Precision.HIGHEST,
    )


if __name__ == "__main__":
    key = jax.random.PRNGKey(0)

    # Module parameters (deterministic, as in __init__): sigma_{x,y,z} = 2.0
    sigma_x = jnp.float32(2.0)
    sigma_y = jnp.float32(2.0)
    sigma_z = jnp.float32(2.0)
    spacing = (1.0, 1.0, 1.0)

    # Input: N=2, C=1 (groups=C with a [1,1,9,9,9] kernel implies C==1), 16^3 volume.
    x = jax.random.normal(key, (2, 1, 16, 16, 16), dtype=jnp.float32)

    out = blurring_model_forward(x, sigma_x, sigma_y, sigma_z, spacing)
    out = jax.block_until_ready(out)

    ref = _reference_forward(x, sigma_x, sigma_y, sigma_z, spacing)
    max_err = float(jnp.max(jnp.abs(out - ref)))
    assert out.shape == x.shape, (out.shape, x.shape)
    assert max_err < 1e-4, f"mismatch vs reference: {max_err}"

    print("KERNEL_OK")
</pallas_src>

<mosaic_0001>
module attributes {stable_mosaic.version = 11 : i64} {
  func.func @_blur_kernel(%arg0: i32, %arg1: memref<32x256xf32, #tpu.memory_space<vmem>>, %arg2: memref<256x256xf32, #tpu.memory_space<vmem>>, %arg3: memref<32x32xf32, #tpu.memory_space<vmem>>, %arg4: memref<32x256xf32, #tpu.memory_space<vmem>>) attributes {dimension_semantics = [#tpu.dimension_semantics<parallel>], iteration_bounds = array<i64: 1>, scalar_prefetch = 0 : i64, scratch_operands = 0 : i64, tpu.core_type = #tpu.core_type<tc>, window_params = [{transform_indices = @transform_0, window_bounds = array<i64: 32, 256>}, {pipeline_mode = #tpu.pipeline_mode<synchronous>, transform_indices = @transform_1, window_bounds = array<i64: 256, 256>}, {pipeline_mode = #tpu.pipeline_mode<synchronous>, transform_indices = @transform_2, window_bounds = array<i64: 32, 32>}, {transform_indices = @transform_3, window_bounds = array<i64: 32, 256>}]} {
    %c0 = arith.constant 0 : index
    %c0_0 = arith.constant 0 : index
    %0 = vector.load %arg1[%c0, %c0_0] : memref<32x256xf32, #tpu.memory_space<vmem>>, vector<32x256xf32>
    %c0_1 = arith.constant 0 : index
    %c0_2 = arith.constant 0 : index
    %1 = vector.load %arg2[%c0_1, %c0_2] : memref<256x256xf32, #tpu.memory_space<vmem>>, vector<256x256xf32>
    %cst = arith.constant dense<0.000000e+00> : vector<32x256xf32>
    %2 = tpu.matmul %0, %1, %cst {dimension_numbers = #tpu.dot_dimension_numbers<[1], [0], [0], [1], [0, 0, 1, 1], [], []>, precision = #tpu.contract_precision<fp32>} : vector<32x256xf32>, vector<256x256xf32>, vector<32x256xf32> -> vector<32x256xf32>
    %c0_3 = arith.constant 0 : index
    %c0_4 = arith.constant 0 : index
    %3 = vector.load %arg3[%c0_3, %c0_4] : memref<32x32xf32, #tpu.memory_space<vmem>>, vector<32x32xf32>
    %cst_5 = arith.constant dense<0.000000e+00> : vector<32x256xf32>
    %4 = tpu.matmul %3, %2, %cst_5 {dimension_numbers = #tpu.dot_dimension_numbers<[1], [0], [0], [1], [0, 0, 1, 1], [], []>, precision = #tpu.contract_precision<fp32>} : vector<32x32xf32>, vector<32x256xf32>, vector<32x256xf32> -> vector<32x256xf32>
    %c0_6 = arith.constant 0 : index
    %c0_7 = arith.constant 0 : index
    %5 = vector.load %arg4[%c0_6, %c0_7] : memref<32x256xf32, #tpu.memory_space<vmem>>, vector<32x256xf32>
    tpu.vector_store %arg4[%c0_6, %c0_7], %4 {strides = array<i32>} : memref<32x256xf32, #tpu.memory_space<vmem>>, vector<32x256xf32>,
    return
  }
  func.func @transform_0(%arg0: i32) -> (i32, i32) {
    %c0_i32 = arith.constant 0 : i32
    %c0_i32_0 = arith.constant 0 : i32
    return %arg0, %c0_i32 : i32, i32
  }
  func.func @transform_1(%arg0: i32) -> (i32, i32) {
    %c0_i32 = arith.constant 0 : i32
    %c0_i32_0 = arith.constant 0 : i32
    %c0_i32_1 = arith.constant 0 : i32
    return %c0_i32, %c0_i32_0 : i32, i32
  }
  func.func @transform_2(%arg0: i32) -> (i32, i32) {
    %c0_i32 = arith.constant 0 : i32
    %c0_i32_0 = arith.constant 0 : i32
    %c0_i32_1 = arith.constant 0 : i32
    return %c0_i32, %c0_i32_0 : i32, i32
  }
  func.func @transform_3(%arg0: i32) -> (i32, i32) {
    %c0_i32 = arith.constant 0 : i32
    %c0_i32_0 = arith.constant 0 : i32
    return %arg0, %c0_i32 : i32, i32
  }
}

</mosaic_0001>

<llo_original>
// kernel: tpu_custom_call.1
$region0: #{tpu_custom_call.1}
  #allocation0 [shape = 'u32[]', space=smem, size = 0x4, offset = 0x4, fixed_abs, tag = 'smem constant byte address 0x4 - core index']
  #allocation1 [shape = 'u32[72,128]{1,0:T(1,128)}', space=vmem, size = 0x9000, scoped, tag = 'internal scratch']
  %s0 = inlined_call_operand.hbm [shape: f32[32,256], index: 0, kind: input, shape index: {}]
  %s1 = inlined_call_operand.hbm [shape: f32[256,256], index: 1, kind: input, shape index: {}]
  %s2 = inlined_call_operand.hbm [shape: f32[32,32], index: 2, kind: input, shape index: {}]
  %s3 = inlined_call_operand.hbm [shape: f32[32,256], index: 3, kind: output, shape index: {}]
  %s4 = sld [smem:[#allocation0]]
  $region34: #{tpu_custom_call.1} parent=0
    _
  %s6 = ssub.s32 1, %s4
  %s7 = scalar_select 0, %s6, %s4
  $region1: #{tpu_custom_call.1} parent=0
    #allocation2 [shape = 'u8[32768]{0}', space=vmem, size = 0x8000, scoped, tag = 'input window, operand 0, single buffered']
    #allocation3 [shape = 's32[1]{0}', space=sflag, size = 0x4, scoped, tag = 'scoped memory for tpu_custom_call.1']
    #allocation4 [shape = 's32[1]{0}', space=sflag, size = 0x4, scoped, tag = 'scoped memory for tpu_custom_call.1']
    #allocation5 [shape = 'u8[262144]{0}', space=vmem, size = 0x40000, scoped, tag = 'input window, operand 1, single buffered']
    #allocation6 [shape = 's32[1]{0}', space=sflag, size = 0x4, scoped, tag = 'scoped memory for tpu_custom_call.1']
    #allocation7 [shape = 'u8[16384]{0}', space=vmem, size = 0x4000, scoped, tag = 'input window, operand 2, single buffered']
    #allocation8 [shape = 'u8[32768]{0}', space=vmem, size = 0x8000, scoped, tag = 'output window, operand 0, single buffered']
    %8 = vsyncpa [#allocation3], 0
    %9 = vsyncpa [#allocation6], 0
    %10 = vsyncpa [#allocation4], 0
    // Predicated region
    $region2: #{tpu_custom_call.1} parent=1 // pred_check
      _
    $region3: #{tpu_custom_call.1} parent=1 // pred_check_branch
      %12 = sbr.rel (0) target = $region5
    $region4: #{tpu_custom_call.1} parent=1 // pred_region
      %14 = vsyncadd [#allocation3], 0
      %s15 = sshll.u32 %s0, 4
      %s16 = int_to_ptr.hbm [resolvable:$true] %s15
      %s17 = sshll.u32 [#allocation2], 4
      %s18 = int_to_ptr.vmem [resolvable:$true] %s17
      %23 = dma.hbm_to_vmem [thread:$0]  %s16, 1024, %s18, [#allocation3], 256, 256, 16
    $region5: #{tpu_custom_call.1} parent=1 // pred_fallthru
      _
    // Predicated region
    $region6: #{tpu_custom_call.1} parent=1 // pred_check
      _
    $region7: #{tpu_custom_call.1} parent=1 // pred_check_branch
      %25 = sbr.rel (0) target = $region9
    $region8: #{tpu_custom_call.1} parent=1 // pred_region
      %27 = vsyncadd [#allocation6], 0
      %s28 = sshll.u32 %s1, 4
      %s29 = int_to_ptr.hbm [resolvable:$true] %s28
      %s30 = sshll.u32 [#allocation5], 4
      %s31 = int_to_ptr.vmem [resolvable:$true] %s30
      %36 = dma.hbm_to_vmem [thread:$0]  %s29, 8192, %s31, [#allocation6], 256, 256, 16
    $region9: #{tpu_custom_call.1} parent=1 // pred_fallthru
      _
    // Predicated region
    $region10: #{tpu_custom_call.1} parent=1 // pred_check
      _
    $region11: #{tpu_custom_call.1} parent=1 // pred_check_branch
      %38 = sbr.rel (0) target = $region13
    $region12: #{tpu_custom_call.1} parent=1 // pred_region
      %40 = vsyncadd [#allocation6], 0
      %s41 = sshll.u32 %s2, 4
      %s42 = int_to_ptr.hbm [resolvable:$true] %s41
      %s43 = sshll.u32 [#allocation7], 4
      %s44 = int_to_ptr.vmem [resolvable:$true] %s43
      %49 = dma.hbm_to_vmem [thread:$0]  %s42, 512, %s44, [#allocation6], 128, 128, 8
    $region13: #{tpu_custom_call.1} parent=1 // pred_fallthru
      _
    // Predicated region
    $region14: #{tpu_custom_call.1} parent=1 // pred_check
      _
    $region15: #{tpu_custom_call.1} parent=1 // pred_check_branch
      %51 = sbr.rel (0) target = $region17
    $region16: #{tpu_custom_call.1} parent=1 // pred_region
      %53 = dma.done [#allocation3], 1024
    $region17: #{tpu_custom_call.1} parent=1 // pred_fallthru
      _
    // Predicated region
    $region18: #{tpu_custom_call.1} parent=1 // pred_check
      _
    $region19: #{tpu_custom_call.1} parent=1 // pred_check_branch
      %55 = sbr.rel (0) target = $region21
    $region20: #{tpu_custom_call.1} parent=1 // pred_region
      %57 = dma.done [#allocation6], 8192
    $region21: #{tpu_custom_call.1} parent=1 // pred_fallthru
      _
    // Predicated region
    $region22: #{tpu_custom_call.1} parent=1 // pred_check
      _
    $region23: #{tpu_custom_call.1} parent=1 // pred_check_branch
      %59 = sbr.rel (0) target = $region25
    $region24: #{tpu_custom_call.1} parent=1 // pred_region
      %61 = dma.done [#allocation6], 512
    $region25: #{tpu_custom_call.1} parent=1 // pred_fallthru
      _
    %v62 = vld [vmem:[#allocation2] sm:$0xff]
    %v63 = vld [vmem:[#allocation2 + $0x8] sm:$0xff]
    %v64 = vld [vmem:[#allocation2 + $0x10] sm:$0xff]
    %v65 = vld [vmem:[#allocation2 + $0x18] sm:$0xff]
    %v66 = vld [vmem:[#allocation2 + $0x20] sm:$0xff]
    %v67 = vld [vmem:[#allocation2 + $0x28] sm:$0xff]
    %v68 = vld [vmem:[#allocation2 + $0x30] sm:$0xff]
    %v69 = vld [vmem:[#allocation2 + $0x38] sm:$0xff]
    %v70 = vld [vmem:[#allocation5] sm:$0xff]
    %v71 = vld [vmem:[#allocation5 + $0x8] sm:$0xff]
    %v72 = vld [vmem:[#allocation5 + $0x10] sm:$0xff]
    %v73 = vld [vmem:[#allocation5 + $0x18] sm:$0xff]
    %v74 = vld [vmem:[#allocation5 + $0x20] sm:$0xff]
    %v75 = vld [vmem:[#allocation5 + $0x28] sm:$0xff]
    %v76 = vld [vmem:[#allocation5 + $0x30] sm:$0xff]
    %v77 = vld [vmem:[#allocation5 + $0x38] sm:$0xff]
    %v78 = vld [vmem:[#allocation5 + $0x40] sm:$0xff]
    %v79 = vld [vmem:[#allocation5 + $0x48] sm:$0xff]
    %v80 = vld [vmem:[#allocation5 + $0x50] sm:$0xff]
    %v81 = vld [vmem:[#allocation5 + $0x58] sm:$0xff]
    %v82 = vld [vmem:[#allocation5 + $0x60] sm:$0xff]
    %v83 = vld [vmem:[#allocation5 + $0x68] sm:$0xff]
    %v84 = vld [vmem:[#allocation5 + $0x70] sm:$0xff]
    %v85 = vld [vmem:[#allocation5 + $0x78] sm:$0xff]
    %v86 = vld [vmem:[#allocation5 + $0x80] sm:$0xff]
    %v87 = vld [vmem:[#allocation5 + $0x88] sm:$0xff]
    %v88 = vld [vmem:[#allocation5 + $0x90] sm:$0xff]
    %v89 = vld [vmem:[#allocation5 + $0x98] sm:$0xff]
    %v90 = vld [vmem:[#allocation5 + $0xa0] sm:$0xff]
    %v91 = vld [vmem:[#allocation5 + $0xa8] sm:$0xff]
    %v92 = vld [vmem:[#allocation5 + $0xb0] sm:$0xff]
    %v93 = vld [vmem:[#allocation5 + $0xb8] sm:$0xff]
    %v94 = vld [vmem:[#allocation5 + $0xc0] sm:$0xff]
    %v95 = vld [vmem:[#allocation5 + $0xc8] sm:$0xff]
    %v96 = vld [vmem:[#allocation5 + $0xd0] sm:$0xff]
    %v97 = vld [vmem:[#allocation5 + $0xd8] sm:$0xff]
    %v98 = vld [vmem:[#allocation5 + $0xe0] sm:$0xff]
    %v99 = vld [vmem:[#allocation5 + $0xe8] sm:$0xff]
    %v100 = vld [vmem:[#allocation5 + $0xf0] sm:$0xff]
    %v101 = vld [vmem:[#allocation5 + $0xf8] sm:$0xff]
    %v102 = vld [vmem:[#allocation5 + $0x100] sm:$0xff]
    %v103 = vld [vmem:[#allocation5 + $0x108] sm:$0xff]
    %v104 = vld [vmem:[#allocation5 + $0x110] sm:$0xff]
    %v105 = vld [vmem:[#allocation5 + $0x118] sm:$0xff]
    %v106 = vld [vmem:[#allocation5 + $0x120] sm:$0xff]
    %v107 = vld [vmem:[#allocation5 + $0x128] sm:$0xff]
    %v108 = vld [vmem:[#allocation5 + $0x130] sm:$0xff]
    %v109 = vld [vmem:[#allocation5 + $0x138] sm:$0xff]
    %v110 = vld [vmem:[#allocation5 + $0x140] sm:$0xff]
    %v111 = vld [vmem:[#allocation5 + $0x148] sm:$0xff]
    %v112 = vld [vmem:[#allocation5 + $0x150] sm:$0xff]
    %v113 = vld [vmem:[#allocation5 + $0x158] sm:$0xff]
    %v114 = vld [vmem:[#allocation5 + $0x160] sm:$0xff]
    %v115 = vld [vmem:[#allocation5 + $0x168] sm:$0xff]
    %v116 = vld [vmem:[#allocation5 + $0x170] sm:$0xff]
    %v117 = vld [vmem:[#allocation5 + $0x178] sm:$0xff]
    %v118 = vld [vmem:[#allocation5 + $0x180] sm:$0xff]
    %v119 = vld [vmem:[#allocation5 + $0x188] sm:$0xff]
    %v120 = vld [vmem:[#allocation5 + $0x190] sm:$0xff]
    %v121 = vld [vmem:[#allocation5 + $0x198] sm:$0xff]
    %v122 = vld [vmem:[#allocation5 + $0x1a0] sm:$0xff]
    %v123 = vld [vmem:[#allocation5 + $0x1a8] sm:$0xff]
    %v124 = vld [vmem:[#allocation5 + $0x1b0] sm:$0xff]
    %v125 = vld [vmem:[#allocation5 + $0x1b8] sm:$0xff]
    %v126 = vld [vmem:[#allocation5 + $0x1c0] sm:$0xff]
    %v127 = vld [vmem:[#allocation5 + $0x1c8] sm:$0xff]
    %v128 = vld [vmem:[#allocation5 + $0x1d0] sm:$0xff]
    %v129 = vld [vmem:[#allocation5 + $0x1d8] sm:$0xff]
    %v130 = vld [vmem:[#allocation5 + $0x1e0] sm:$0xff]
    %v131 = vld [vmem:[#allocation5 + $0x1e8] sm:$0xff]
    %v132 = vld [vmem:[#allocation5 + $0x1f0] sm:$0xff]
    %v133 = vld [vmem:[#allocation5 + $0x1f8] sm:$0xff]
    %v134 = vand.u32 %v100, 4294901760
    %135 = vmatpush.msra.mxu0 %v134
    %v136 = vand.u32 %v98, 4294901760
    %137 = vmatpush.msra.mxu0 %v136
    %v138 = vand.u32 %v96, 4294901760
    %139 = vmatpush.msra.mxu0 %v138
    %v140 = vand.u32 %v94, 4294901760
    %141 = vmatpush.msra.mxu0 %v140
    %v142 = vand.u32 %v92, 4294901760
    %143 = vmatpush.msra.mxu0 %v142
    %v144 = vand.u32 %v90, 4294901760
    %145 = vmatpush.msra.mxu0 %v144
    %v146 = vand.u32 %v88, 4294901760
    %147 = vmatpush.msra.mxu0 %v146
    %v148 = vand.u32 %v86, 4294901760
    %149 = vmatpush.msra.mxu0 %v148
    %v150 = vand.u32 %v84, 4294901760
    %151 = vmatpush.msra.mxu0 %v150
    %v152 = vand.u32 %v82, 4294901760
    %153 = vmatpush.msra.mxu0 %v152
    %v154 = vand.u32 %v80, 4294901760
    %155 = vmatpush.msra.mxu0 %v154
    %v156 = vand.u32 %v78, 4294901760
    %157 = vmatpush.msra.mxu0 %v156
    %v158 = vand.u32 %v76, 4294901760
    %159 = vmatpush.msra.mxu0 %v158
    %v160 = vand.u32 %v74, 4294901760
    %161 = vmatpush.msra.mxu0 %v160
    %v162 = vand.u32 %v72, 4294901760
    %163 = vmatpush.msra.mxu0 %v162
    %v164 = vand.u32 %v70, 4294901760
    %165 = vmatpush.msra.mxu0 %v164
    %v166 = vand.u32 %v62, 4294901760
    %v167 = vsub.f32 %v62, %v166
    %v168 = vand.u32 %v167, 4294901760
    %v169 = vsub.f32 %v167, %v168
    %v170 = vand.u32 %v169, 4294901760
    %171 = vmatmul.f32.gmra.mxu0 %v170
    %v172 = vpop.f32.mrf.mxu0
    %v173 = vadd.f32 0.0, %v172
    %v174 = vand.u32 %v64, 4294901760
    %v175 = vsub.f32 %v64, %v174
    %v176 = vand.u32 %v175, 4294901760
    %v177 = vsub.f32 %v175, %v176
    %v178 = vand.u32 %v177, 4294901760
    %179 = vmatmul.f32.gmra.mxu0 %v178
    %v180 = vpop.f32.mrf.mxu0
    %v181 = vadd.f32 0.0, %v180
    %v182 = vand.u32 %v66, 4294901760
    %v183 = vsub.f32 %v66, %v182
    %v184 = vand.u32 %v183, 4294901760
    %v185 = vsub.f32 %v183, %v184
    %v186 = vand.u32 %v185, 4294901760
    %187 = vmatmul.f32.gmra.mxu0 %v186
    %v188 = vpop.f32.mrf.mxu0
    %v189 = vadd.f32 0.0, %v188
    %v190 = vand.u32 %v68, 4294901760
    %v191 = vsub.f32 %v68, %v190
    %v192 = vand.u32 %v191, 4294901760
    %v193 = vsub.f32 %v191, %v192
    %v194 = vand.u32 %v193, 4294901760
    %195 = vmatmul.f32.gmra.mxu0 %v194
    %v196 = vpop.f32.mrf.mxu0
    %v197 = vadd.f32 0.0, %v196
    %198 = vdwg.mxu0
    %v199 = vand.u32 %v100, 4294901760
    %v200 = vsub.f32 %v100, %v199
    %v201 = vand.u32 %v200, 4294901760
    %v202 = vsub.f32 %v200, %v201
    %v203 = vand.u32 %v202, 4294901760
    %204 = vmatpush.msra.mxu0 %v203
    %v205 = vand.u32 %v98, 4294901760
    %v206 = vsub.f32 %v98, %v205
    %v207 = vand.u32 %v206, 4294901760
    %v208 = vsub.f32 %v206, %v207
    %v209 = vand.u32 %v208, 4294901760
    %210 = vmatpush.msra.mxu0 %v209
    %v211 = vand.u32 %v96, 4294901760
    %v212 = vsub.f32 %v96, %v211
    %v213 = vand.u32 %v212, 4294901760
    %v214 = vsub.f32 %v212, %v213
    %v215 = vand.u32 %v214, 4294901760
    %216 = vmatpush.msra.mxu0 %v215
    %v217 = vand.u32 %v94, 4294901760
    %v218 = vsub.f32 %v94, %v217
    %v219 = vand.u32 %v218, 4294901760
    %v220 = vsub.f32 %v218, %v219
    %v221 = vand.u32 %v220, 4294901760
    %222 = vmatpush.msra.mxu0 %v221
    %v223 = vand.u32 %v92, 4294901760
    %v224 = vsub.f32 %v92, %v223
    %v225 = vand.u32 %v224, 4294901760
    %v226 = vsub.f32 %v224, %v225
    %v227 = vand.u32 %v226, 4294901760
    %228 = vmatpush.msra.mxu0 %v227
    %v229 = vand.u32 %v90, 4294901760
    %v230 = vsub.f32 %v90, %v229
    %v231 = vand.u32 %v230, 4294901760
    %v232 = vsub.f32 %v230, %v231
    %v233 = vand.u32 %v232, 4294901760
    %234 = vmatpush.msra.mxu0 %v233
    %v235 = vand.u32 %v88, 4294901760
    %v236 = vsub.f32 %v88, %v235
    %v237 = vand.u32 %v236, 4294901760
    %v238 = vsub.f32 %v236, %v237
    %v239 = vand.u32 %v238, 4294901760
    %240 = vmatpush.msra.mxu0 %v239
    %v241 = vand.u32 %v86, 4294901760
    %v242 = vsub.f32 %v86, %v241
    %v243 = vand.u32 %v242, 4294901760
    %v244 = vsub.f32 %v242, %v243
    %v245 = vand.u32 %v244, 4294901760
    %246 = vmatpush.msra.mxu0 %v245
    %v247 = vand.u32 %v84, 4294901760
    %v248 = vsub.f32 %v84, %v247
    %v249 = vand.u32 %v248, 4294901760
    %v250 = vsub.f32 %v248, %v249
    %v251 = vand.u32 %v250, 4294901760
    %252 = vmatpush.msra.mxu0 %v251
    %v253 = vand.u32 %v82, 4294901760
    %v254 = vsub.f32 %v82, %v253
    %v255 = vand.u32 %v254, 4294901760
    %v256 = vsub.f32 %v254, %v255
    %v257 = vand.u32 %v256, 4294901760
    %258 = vmatpush.msra.mxu0 %v257
    %v259 = vand.u32 %v80, 4294901760
    %v260 = vsub.f32 %v80, %v259
    %v261 = vand.u32 %v260, 4294901760
    %v262 = vsub.f32 %v260, %v261
    %v263 = vand.u32 %v262, 4294901760
    %264 = vmatpush.msra.mxu0 %v263
    %v265 = vand.u32 %v78, 4294901760
    %v266 = vsub.f32 %v78, %v265
    %v267 = vand.u32 %v266, 4294901760
    %v268 = vsub.f32 %v266, %v267
    %v269 = vand.u32 %v268, 4294901760
    %270 = vmatpush.msra.mxu0 %v269
    %v271 = vand.u32 %v76, 4294901760
    %v272 = vsub.f32 %v76, %v271
    %v273 = vand.u32 %v272, 4294901760
    %v274 = vsub.f32 %v272, %v273
    %v275 = vand.u32 %v274, 4294901760
    %276 = vmatpush.msra.mxu0 %v275
    %v277 = vand.u32 %v74, 4294901760
    %v278 = vsub.f32 %v74, %v277
    %v279 = vand.u32 %v278, 4294901760
    %v280 = vsub.f32 %v278, %v279
    %v281 = vand.u32 %v280, 4294901760
    %282 = vmatpush.msra.mxu0 %v281
    %v283 = vand.u32 %v72, 4294901760
    %v284 = vsub.f32 %v72, %v283
    %v285 = vand.u32 %v284, 4294901760
    %v286 = vsub.f32 %v284, %v285
    %v287 = vand.u32 %v286, 4294901760
    %288 = vmatpush.msra.mxu0 %v287
    %v289 = vand.u32 %v70, 4294901760
    %v290 = vsub.f32 %v70, %v289
    %v291 = vand.u32 %v290, 4294901760
    %v292 = vsub.f32 %v290, %v291
    %v293 = vand.u32 %v292, 4294901760
    %294 = vmatpush.msra.mxu0 %v293
    %v295 = vand.u32 %v62, 4294901760
    %296 = vmatmul.f32.gmra.mxu0 %v295
    %v297 = vpop.f32.mrf.mxu0
    %v298 = vadd.f32 %v173, %v297
    %v299 = vand.u32 %v64, 4294901760
    %300 = vmatmul.f32.gmra.mxu0 %v299
    %v301 = vpop.f32.mrf.mxu0
    %v302 = vadd.f32 %v181, %v301
    %v303 = vand.u32 %v66, 4294901760
    %304 = vmatmul.f32.gmra.mxu0 %v303
    %v305 = vpop.f32.mrf.mxu0
    %v306 = vadd.f32 %v189, %v305
    %v307 = vand.u32 %v68, 4294901760
    %308 = vmatmul.f32.gmra.mxu0 %v307
    %v309 = vpop.f32.mrf.mxu0
    %v310 = vadd.f32 %v197, %v309
    %311 = vdwg.mxu0
    %v312 = vand.u32 %v100, 4294901760
    %v313 = vsub.f32 %v100, %v312
    %314 = vmatpush.msra.mxu0 %v313
    %v315 = vand.u32 %v98, 4294901760
    %v316 = vsub.f32 %v98, %v315
    %317 = vmatpush.msra.mxu0 %v316
    %v318 = vand.u32 %v96, 4294901760
    %v319 = vsub.f32 %v96, %v318
    %320 = vmatpush.msra.mxu0 %v319
    %v321 = vand.u32 %v94, 4294901760
    %v322 = vsub.f32 %v94, %v321
    %323 = vmatpush.msra.mxu0 %v322
    %v324 = vand.u32 %v92, 4294901760
    %v325 = vsub.f32 %v92, %v324
    %326 = vmatpush.msra.mxu0 %v325
    %v327 = vand.u32 %v90, 4294901760
    %v328 = vsub.f32 %v90, %v327
    %329 = vmatpush.msra.mxu0 %v328
    %v330 = vand.u32 %v88, 4294901760
    %v331 = vsub.f32 %v88, %v330
    %332 = vmatpush.msra.mxu0 %v331
    %v333 = vand.u32 %v86, 4294901760
    %v334 = vsub.f32 %v86, %v333
    %335 = vmatpush.msra.mxu0 %v334
    %v336 = vand.u32 %v84, 4294901760
    %v337 = vsub.f32 %v84, %v336
    %338 = vmatpush.msra.mxu0 %v337
    %v339 = vand.u32 %v82, 4294901760
    %v340 = vsub.f32 %v82, %v339
    %341 = vmatpush.msra.mxu0 %v340
    %v342 = vand.u32 %v80, 4294901760
    %v343 = vsub.f32 %v80, %v342
    %344 = vmatpush.msra.mxu0 %v343
    %v345 = vand.u32 %v78, 4294901760
    %v346 = vsub.f32 %v78, %v345
    %347 = vmatpush.msra.mxu0 %v346
    %v348 = vand.u32 %v76, 4294901760
    %v349 = vsub.f32 %v76, %v348
    %350 = vmatpush.msra.mxu0 %v349
    %v351 = vand.u32 %v74, 4294901760
    %v352 = vsub.f32 %v74, %v351
    %353 = vmatpush.msra.mxu0 %v352
    %v354 = vand.u32 %v72, 4294901760
    %v355 = vsub.f32 %v72, %v354
    %356 = vmatpush.msra.mxu0 %v355
    %v357 = vand.u32 %v70, 4294901760
    %v358 = vsub.f32 %v70, %v357
    %359 = vmatpush.msra.mxu0 %v358
    %v360 = vand.u32 %v62, 4294901760
    %v361 = vsub.f32 %v62, %v360
    %362 = vmatmul.f32.gmra.mxu0 %v361
    %v363 = vpop.f32.mrf.mxu0
    %v364 = vadd.f32 %v298, %v363
    %v365 = vand.u32 %v64, 4294901760
    %v366 = vsub.f32 %v64, %v365
    %367 = vmatmul.f32.gmra.mxu0 %v366
    %v368 = vpop.f32.mrf.mxu0
    %v369 = vadd.f32 %v302, %v368
    %v370 = vand.u32 %v66, 4294901760
    %v371 = vsub.f32 %v66, %v370
    %372 = vmatmul.f32.gmra.mxu0 %v371
    %v373 = vpop.f32.mrf.mxu0
    %v374 = vadd.f32 %v306, %v373
    %v375 = vand.u32 %v68, 4294901760
    %v376 = vsub.f32 %v68, %v375
    %377 = vmatmul.f32.gmra.mxu0 %v376
    %v378 = vpop.f32.mrf.mxu0
    %v379 = vadd.f32 %v310, %v378
    %380 = vdwg.mxu0
    %v381 = vand.u32 %v100, 4294901760
    %382 = vmatpush.msra.mxu0 %v381
    %v383 = vand.u32 %v98, 4294901760
    %384 = vmatpush.msra.mxu0 %v383
    %v385 = vand.u32 %v96, 4294901760
    %386 = vmatpush.msra.mxu0 %v385
    %v387 = vand.u32 %v94, 4294901760
    %388 = vmatpush.msra.mxu0 %v387
    %v389 = vand.u32 %v92, 4294901760
    %390 = vmatpush.msra.mxu0 %v389
    %v391 = vand.u32 %v90, 4294901760
    %392 = vmatpush.msra.mxu0 %v391
    %v393 = vand.u32 %v88, 4294901760
    %394 = vmatpush.msra.mxu0 %v393
    %v395 = vand.u32 %v86, 4294901760
    %396 = vmatpush.msra.mxu0 %v395
    %v397 = vand.u32 %v84, 4294901760
    %398 = vmatpush.msra.mxu0 %v397
    %v399 = vand.u32 %v82, 4294901760
    %400 = vmatpush.msra.mxu0 %v399
    %v401 = vand.u32 %v80, 4294901760
    %402 = vmatpush.msra.mxu0 %v401
    %v403 = vand.u32 %v78, 4294901760
    %404 = vmatpush.msra.mxu0 %v403
    %v405 = vand.u32 %v76, 4294901760
    %406 = vmatpush.msra.mxu0 %v405
    %v407 = vand.u32 %v74, 4294901760
    %408 = vmatpush.msra.mxu0 %v407
    %v409 = vand.u32 %v72, 4294901760
    %410 = vmatpush.msra.mxu0 %v409
    %v411 = vand.u32 %v70, 4294901760
    %412 = vmatpush.msra.mxu0 %v411
    %v413 = vand.u32 %v62, 4294901760
    %v414 = vsub.f32 %v62, %v413
    %v415 = vand.u32 %v414, 4294901760
    %416 = vmatmul.f32.gmra.mxu0 %v415
    %v417 = vpop.f32.mrf.mxu0
    %v418 = vadd.f32 %v364, %v417
    %v419 = vand.u32 %v64, 4294901760
    %v420 = vsub.f32 %v64, %v419
    %v421 = vand.u32 %v420, 4294901760
    %422 = vmatmul.f32.gmra.mxu0 %v421
    %v423 = vpop.f32.mrf.mxu0
    %v424 = vadd.f32 %v369, %v423
    %v425 = vand.u32 %v66, 4294901760
    %v426 = vsub.f32 %v66, %v425
    %v427 = vand.u32 %v426, 4294901760
    %428 = vmatmul.f32.gmra.mxu0 %v427
    %v429 = vpop.f32.mrf.mxu0
    %v430 = vadd.f32 %v374, %v429
    %v431 = vand.u32 %v68, 4294901760
    %v432 = vsub.f32 %v68, %v431
    %v433 = vand.u32 %v432, 4294901760
    %434 = vmatmul.f32.gmra.mxu0 %v433
    %v435 = vpop.f32.mrf.mxu0
    %v436 = vadd.f32 %v379, %v435
    %437 = vdwg.mxu0
    %v438 = vand.u32 %v100, 4294901760
    %v439 = vsub.f32 %v100, %v438
    %v440 = vand.u32 %v439, 4294901760
    %441 = vmatpush.msra.mxu0 %v440
    %v442 = vand.u32 %v98, 4294901760
    %v443 = vsub.f32 %v98, %v442
    %v444 = vand.u32 %v443, 4294901760
    %445 = vmatpush.msra.mxu0 %v444
    %v446 = vand.u32 %v96, 4294901760
    %v447 = vsub.f32 %v96, %v446
    %v448 = vand.u32 %v447, 4294901760
    %449 = vmatpush.msra.mxu0 %v448
    %v450 = vand.u32 %v94, 4294901760
    %v451 = vsub.f32 %v94, %v450
    %v452 = vand.u32 %v451, 4294901760
    %453 = vmatpush.msra.mxu0 %v452
    %v454 = vand.u32 %v92, 4294901760
    %v455 = vsub.f32 %v92, %v454
    %v456 = vand.u32 %v455, 4294901760
    %457 = vmatpush.msra.mxu0 %v456
    %v458 = vand.u32 %v90, 4294901760
    %v459 = vsub.f32 %v90, %v458
    %v460 = vand.u32 %v459, 4294901760
    %461 = vmatpush.msra.mxu0 %v460
    %v462 = vand.u32 %v88, 4294901760
    %v463 = vsub.f32 %v88, %v462
    %v464 = vand.u32 %v463, 4294901760
    %465 = vmatpush.msra.mxu0 %v464
    %v466 = vand.u32 %v86, 4294901760
    %v467 = vsub.f32 %v86, %v466
    %v468 = vand.u32 %v467, 4294901760
    %469 = vmatpush.msra.mxu0 %v468
    %v470 = vand.u32 %v84, 4294901760
    %v471 = vsub.f32 %v84, %v470
    %v472 = vand.u32 %v471, 4294901760
    %473 = vmatpush.msra.mxu0 %v472
    %v474 = vand.u32 %v82, 4294901760
    %v475 = vsub.f32 %v82, %v474
    %v476 = vand.u32 %v475, 4294901760
    %477 = vmatpush.msra.mxu0 %v476
    %v478 = vand.u32 %v80, 4294901760
    %v479 = vsub.f32 %v80, %v478
    %v480 = vand.u32 %v479, 4294901760
    %481 = vmatpush.msra.mxu0 %v480
    %v482 = vand.u32 %v78, 4294901760
    %v483 = vsub.f32 %v78, %v482
    %v484 = vand.u32 %v483, 4294901760
    %485 = vmatpush.msra.mxu0 %v484
    %v486 = vand.u32 %v76, 4294901760
    %v487 = vsub.f32 %v76, %v486
    %v488 = vand.u32 %v487, 4294901760
    %489 = vmatpush.msra.mxu0 %v488
    %v490 = vand.u32 %v74, 4294901760
    %v491 = vsub.f32 %v74, %v490
    %v492 = vand.u32 %v491, 4294901760
    %493 = vmatpush.msra.mxu0 %v492
    %v494 = vand.u32 %v72, 4294901760
    %v495 = vsub.f32 %v72, %v494
    %v496 = vand.u32 %v495, 4294901760
    %497 = vmatpush.msra.mxu0 %v496
    %v498 = vand.u32 %v70, 4294901760
    %v499 = vsub.f32 %v70, %v498
    %v500 = vand.u32 %v499, 4294901760
    %501 = vmatpush.msra.mxu0 %v500
    %v502 = vand.u32 %v62, 4294901760
    %503 = vmatmul.f32.gmra.mxu0 %v502
    %v504 = vpop.f32.mrf.mxu0
    %v505 = vadd.f32 %v418, %v504
    %v506 = vand.u32 %v64, 4294901760
    %507 = vmatmul.f32.gmra.mxu0 %v506
    %v508 = vpop.f32.mrf.mxu0
    %v509 = vadd.f32 %v424, %v508
    %v510 = vand.u32 %v66, 4294901760
    %511 = vmatmul.f32.gmra.mxu0 %v510
    %v512 = vpop.f32.mrf.mxu0
    %v513 = vadd.f32 %v430, %v512
    %v514 = vand.u32 %v68, 4294901760
    %515 = vmatmul.f32.gmra.mxu0 %v514
    %v516 = vpop.f32.mrf.mxu0
    %v517 = vadd.f32 %v436, %v516
    %518 = vdwg.mxu0
    %v519 = vand.u32 %v100, 4294901760
    %520 = vmatpush.msra.mxu0 %v519
    %v521 = vand.u32 %v98, 4294901760
    %522 = vmatpush.msra.mxu0 %v521
    %v523 = vand.u32 %v96, 4294901760
    %524 = vmatpush.msra.mxu0 %v523
    %v525 = vand.u32 %v94, 4294901760
    %526 = vmatpush.msra.mxu0 %v525
    %v527 = vand.u32 %v92, 4294901760
    %528 = vmatpush.msra.mxu0 %v527
    %v529 = vand.u32 %v90, 4294901760
    %530 = vmatpush.msra.mxu0 %v529
    %v531 = vand.u32 %v88, 4294901760
    %532 = vmatpush.msra.mxu0 %v531
    %v533 = vand.u32 %v86, 4294901760
    %534 = vmatpush.msra.mxu0 %v533
    %v535 = vand.u32 %v84, 4294901760
    %536 = vmatpush.msra.mxu0 %v535
    %v537 = vand.u32 %v82, 4294901760
    %538 = vmatpush.msra.mxu0 %v537
    %v539 = vand.u32 %v80, 4294901760
    %540 = vmatpush.msra.mxu0 %v539
    %v541 = vand.u32 %v78, 4294901760
    %542 = vmatpush.msra.mxu0 %v541
    %v543 = vand.u32 %v76, 4294901760
    %544 = vmatpush.msra.mxu0 %v543
    %v545 = vand.u32 %v74, 4294901760
    %546 = vmatpush.msra.mxu0 %v545
    %v547 = vand.u32 %v72, 4294901760
    %548 = vmatpush.msra.mxu0 %v547
    %v549 = vand.u32 %v70, 4294901760
    %550 = vmatpush.msra.mxu0 %v549
    %v551 = vand.u32 %v62, 4294901760
    %552 = vmatmul.f32.gmra.mxu0 %v551
    %v553 = vpop.f32.mrf.mxu0
    %v554 = vadd.f32 %v505, %v553
    %v555 = vand.u32 %v64, 4294901760
    %556 = vmatmul.f32.gmra.mxu0 %v555
    %v557 = vpop.f32.mrf.mxu0
    %v558 = vadd.f32 %v509, %v557
    %v559 = vand.u32 %v66, 4294901760
    %560 = vmatmul.f32.gmra.mxu0 %v559
    %v561 = vpop.f32.mrf.mxu0
    %v562 = vadd.f32 %v513, %v561
    %v563 = vand.u32 %v68, 4294901760
    %564 = vmatmul.f32.gmra.mxu0 %v563
    %v565 = vpop.f32.mrf.mxu0
    %v566 = vadd.f32 %v517, %v565
    %567 = vdwg.mxu0
    %v568 = vand.u32 %v132, 4294901760
    %569 = vmatpush.msra.mxu0 %v568
    %v570 = vand.u32 %v130, 4294901760
    %571 = vmatpush.msra.mxu0 %v570
    %v572 = vand.u32 %v128, 4294901760
    %573 = vmatpush.msra.mxu0 %v572
    %v574 = vand.u32 %v126, 4294901760
    %575 = vmatpush.msra.mxu0 %v574
    %v576 = vand.u32 %v124, 4294901760
    %577 = vmatpush.msra.mxu0 %v576
    %v578 = vand.u32 %v122, 4294901760
    %579 = vmatpush.msra.mxu0 %v578
    %v580 = vand.u32 %v120, 4294901760
    %581 = vmatpush.msra.mxu0 %v580
    %v582 = vand.u32 %v118, 4294901760
    %583 = vmatpush.msra.mxu0 %v582
    %v584 = vand.u32 %v116, 4294901760
    %585 = vmatpush.msra.mxu0 %v584
    %v586 = vand.u32 %v114, 4294901760
    %587 = vmatpush.msra.mxu0 %v586
    %v588 = vand.u32 %v112, 4294901760
    %589 = vmatpush.msra.mxu0 %v588
    %v590 = vand.u32 %v110, 4294901760
    %591 = vmatpush.msra.mxu0 %v590
    %v592 = vand.u32 %v108, 4294901760
    %593 = vmatpush.msra.mxu0 %v592
    %v594 = vand.u32 %v106, 4294901760
    %595 = vmatpush.msra.mxu0 %v594
    %v596 = vand.u32 %v104, 4294901760
    %597 = vmatpush.msra.mxu0 %v596
    %v598 = vand.u32 %v102, 4294901760
    %599 = vmatpush.msra.mxu0 %v598
    %v600 = vand.u32 %v63, 4294901760
    %v601 = vsub.f32 %v63, %v600
    %v602 = vand.u32 %v601, 4294901760
    %v603 = vsub.f32 %v601, %v602
    %v604 = vand.u32 %v603, 4294901760
    %605 = vmatmul.f32.gmra.mxu0 %v604
    %v606 = vpop.f32.mrf.mxu0
    %v607 = vadd.f32 %v554, %v606
    %v608 = vand.u32 %v65, 4294901760
    %v609 = vsub.f32 %v65, %v608
    %v610 = vand.u32 %v609, 4294901760
    %v611 = vsub.f32 %v609, %v610
    %v612 = vand.u32 %v611, 4294901760
    %613 = vmatmul.f32.gmra.mxu0 %v612
    %v614 = vpop.f32.mrf.mxu0
    %v615 = vadd.f32 %v558, %v614
    %v616 = vand.u32 %v67, 4294901760
    %v617 = vsub.f32 %v67, %v616
    %v618 = vand.u32 %v617, 4294901760
    %v619 = vsub.f32 %v617, %v618
    %v620 = vand.u32 %v619, 4294901760
    %621 = vmatmul.f32.gmra.mxu0 %v620
    %v622 = vpop.f32.mrf.mxu0
    %v623 = vadd.f32 %v562, %v622
    %v624 = vand.u32 %v69, 4294901760
    %v625 = vsub.f32 %v69, %v624
    %v626 = vand.u32 %v625, 4294901760
    %v627 = vsub.f32 %v625, %v626
    %v628 = vand.u32 %v627, 4294901760
    %629 = vmatmul.f32.gmra.mxu0 %v628
    %v630 = vpop.f32.mrf.mxu0
    %v631 = vadd.f32 %v566, %v630
    %632 = vdwg.mxu0
    %v633 = vand.u32 %v132, 4294901760
    %v634 = vsub.f32 %v132, %v633
    %v635 = vand.u32 %v634, 4294901760
    %v636 = vsub.f32 %v634, %v635
    %v637 = vand.u32 %v636, 4294901760
    %638 = vmatpush.msra.mxu0 %v637
    %v639 = vand.u32 %v130, 4294901760
    %v640 = vsub.f32 %v130, %v639
    %v641 = vand.u32 %v640, 4294901760
    %v642 = vsub.f32 %v640, %v641
    %v643 = vand.u32 %v642, 4294901760
    %644 = vmatpush.msra.mxu0 %v643
    %v645 = vand.u32 %v128, 4294901760
    %v646 = vsub.f32 %v128, %v645
    %v647 = vand.u32 %v646, 4294901760
    %v648 = vsub.f32 %v646, %v647
    %v649 = vand.u32 %v648, 4294901760
    %650 = vmatpush.msra.mxu0 %v649
    %v651 = vand.u32 %v126, 4294901760
    %v652 = vsub.f32 %v126, %v651
    %v653 = vand.u32 %v652, 4294901760
    %v654 = vsub.f32 %v652, %v653
    %v655 = vand.u32 %v654, 4294901760
    %656 = vmatpush.msra.mxu0 %v655
    %v657 = vand.u32 %v124, 4294901760
    %v658 = vsub.f32 %v124, %v657
    %v659 = vand.u32 %v658, 4294901760
    %v660 = vsub.f32 %v658, %v659
    %v661 = vand.u32 %v660, 4294901760
    %662 = vmatpush.msra.mxu0 %v661
    %v663 = vand.u32 %v122, 4294901760
    %v664 = vsub.f32 %v122, %v663
    %v665 = vand.u32 %v664, 4294901760
    %v666 = vsub.f32 %v664, %v665
    %v667 = vand.u32 %v666, 4294901760
    %668 = vmatpush.msra.mxu0 %v667
    %v669 = vand.u32 %v120, 4294901760
    %v670 = vsub.f32 %v120, %v669
    %v671 = vand.u32 %v670, 4294901760
    %v672 = vsub.f32 %v670, %v671
    %v673 = vand.u32 %v672, 4294901760
    %674 = vmatpush.msra.mxu0 %v673
    %v675 = vand.u32 %v118, 4294901760
    %v676 = vsub.f32 %v118, %v675
    %v677 = vand.u32 %v676, 4294901760
    %v678 = vsub.f32 %v676, %v677
    %v679 = vand.u32 %v678, 4294901760
    %680 = vmatpush.msra.mxu0 %v679
    %v681 = vand.u32 %v116, 4294901760
    %v682 = vsub.f32 %v116, %v681
    %v683 = vand.u32 %v682, 4294901760
    %v684 = vsub.f32 %v682, %v683
    %v685 = vand.u32 %v684, 4294901760
    %686 = vmatpush.msra.mxu0 %v685
    %v687 = vand.u32 %v114, 4294901760
    %v688 = vsub.f32 %v114, %v687
    %v689 = vand.u32 %v688, 4294901760
    %v690 = vsub.f32 %v688, %v689
    %v691 = vand.u32 %v690, 4294901760
    %692 = vmatpush.msra.mxu0 %v691
    %v693 = vand.u32 %v112, 4294901760
    %v694 = vsub.f32 %v112, %v693
    %v695 = vand.u32 %v694, 4294901760
    %v696 = vsub.f32 %v694, %v695
    %v697 = vand.u32 %v696, 4294901760
    %698 = vmatpush.msra.mxu0 %v697
    %v699 = vand.u32 %v110, 4294901760
    %v700 = vsub.f32 %v110, %v699
    %v701 = vand.u32 %v700, 4294901760
    %v702 = vsub.f32 %v700, %v701
    %v703 = vand.u32 %v702, 4294901760
    %704 = vmatpush.msra.mxu0 %v703
    %v705 = vand.u32 %v108, 4294901760
    %v706 = vsub.f32 %v108, %v705
    %v707 = vand.u32 %v706, 4294901760
    %v708 = vsub.f32 %v706, %v707
    %v709 = vand.u32 %v708, 4294901760
    %710 = vmatpush.msra.mxu0 %v709
    %v711 = vand.u32 %v106, 4294901760
    %v712 = vsub.f32 %v106, %v711
    %v713 = vand.u32 %v712, 4294901760
    %v714 = vsub.f32 %v712, %v713
    %v715 = vand.u32 %v714, 4294901760
    %716 = vmatpush.msra.mxu0 %v715
    %v717 = vand.u32 %v104, 4294901760
    %v718 = vsub.f32 %v104, %v717
    %v719 = vand.u32 %v718, 4294901760
    %v720 = vsub.f32 %v718, %v719
    %v721 = vand.u32 %v720, 4294901760
    %722 = vmatpush.msra.mxu0 %v721
    %v723 = vand.u32 %v102, 4294901760
    %v724 = vsub.f32 %v102, %v723
    %v725 = vand.u32 %v724, 4294901760
    %v726 = vsub.f32 %v724, %v725
    %v727 = vand.u32 %v726, 4294901760
    %728 = vmatpush.msra.mxu0 %v727
    %v729 = vand.u32 %v63, 4294901760
    %730 = vmatmul.f32.gmra.mxu0 %v729
    %v731 = vpop.f32.mrf.mxu0
    %v732 = vadd.f32 %v607, %v731
    %v733 = vand.u32 %v65, 4294901760
    %734 = vmatmul.f32.gmra.mxu0 %v733
    %v735 = vpop.f32.mrf.mxu0
    %v736 = vadd.f32 %v615, %v735
    %v737 = vand.u32 %v67, 4294901760
    %738 = vmatmul.f32.gmra.mxu0 %v737
    %v739 = vpop.f32.mrf.mxu0
    %v740 = vadd.f32 %v623, %v739
    %v741 = vand.u32 %v69, 4294901760
    %742 = vmatmul.f32.gmra.mxu0 %v741
    %v743 = vpop.f32.mrf.mxu0
    %v744 = vadd.f32 %v631, %v743
    %745 = vdwg.mxu0
    %v746 = vand.u32 %v132, 4294901760
    %v747 = vsub.f32 %v132, %v746
    %748 = vmatpush.msra.mxu0 %v747
    %v749 = vand.u32 %v130, 4294901760
    %v750 = vsub.f32 %v130, %v749
    %751 = vmatpush.msra.mxu0 %v750
    %v752 = vand.u32 %v128, 4294901760
    %v753 = vsub.f32 %v128, %v752
    %754 = vmatpush.msra.mxu0 %v753
    %v755 = vand.u32 %v126, 4294901760
    %v756 = vsub.f32 %v126, %v755
    %757 = vmatpush.msra.mxu0 %v756
    %v758 = vand.u32 %v124, 4294901760
    %v759 = vsub.f32 %v124, %v758
    %760 = vmatpush.msra.mxu0 %v759
    %v761 = vand.u32 %v122, 4294901760
    %v762 = vsub.f32 %v122, %v761
    %763 = vmatpush.msra.mxu0 %v762
    %v764 = vand.u32 %v120, 4294901760
    %v765 = vsub.f32 %v120, %v764
    %766 = vmatpush.msra.mxu0 %v765
    %v767 = vand.u32 %v118, 4294901760
    %v768 = vsub.f32 %v118, %v767
    %769 = vmatpush.msra.mxu0 %v768
    %v770 = vand.u32 %v116, 4294901760
    %v771 = vsub.f32 %v116, %v770
    %772 = vmatpush.msra.mxu0 %v771
    %v773 = vand.u32 %v114, 4294901760
    %v774 = vsub.f32 %v114, %v773
    %775 = vmatpush.msra.mxu0 %v774
    %v776 = vand.u32 %v112, 4294901760
    %v777 = vsub.f32 %v112, %v776
    %778 = vmatpush.msra.mxu0 %v777
    %v779 = vand.u32 %v110, 4294901760
    %v780 = vsub.f32 %v110, %v779
    %781 = vmatpush.msra.mxu0 %v780
    %v782 = vand.u32 %v108, 4294901760
    %v783 = vsub.f32 %v108, %v782
    %784 = vmatpush.msra.mxu0 %v783
    %v785 = vand.u32 %v106, 4294901760
    %v786 = vsub.f32 %v106, %v785
    %787 = vmatpush.msra.mxu0 %v786
    %v788 = vand.u32 %v104, 4294901760
    %v789 = vsub.f32 %v104, %v788
    %790 = vmatpush.msra.mxu0 %v789
    %v791 = vand.u32 %v102, 4294901760
    %v792 = vsub.f32 %v102, %v791
    %793 = vmatpush.msra.mxu0 %v792
    %v794 = vand.u32 %v63, 4294901760
    %v795 = vsub.f32 %v63, %v794
    %796 = vmatmul.f32.gmra.mxu0 %v795
    %v797 = vpop.f32.mrf.mxu0
    %v798 = vadd.f32 %v732, %v797
    %v799 = vand.u32 %v65, 4294901760
    %v800 = vsub.f32 %v65, %v799
    %801 = vmatmul.f32.gmra.mxu0 %v800
    %v802 = vpop.f32.mrf.mxu0
    %v803 = vadd.f32 %v736, %v802
    %v804 = vand.u32 %v67, 4294901760
    %v805 = vsub.f32 %v67, %v804
    %806 = vmatmul.f32.gmra.mxu0 %v805
    %v807 = vpop.f32.mrf.mxu0
    %v808 = vadd.f32 %v740, %v807
    %v809 = vand.u32 %v69, 4294901760
    %v810 = vsub.f32 %v69, %v809
    %811 = vmatmul.f32.gmra.mxu0 %v810
    %v812 = vpop.f32.mrf.mxu0
    %v813 = vadd.f32 %v744, %v812
    %814 = vdwg.mxu0
    %v815 = vand.u32 %v132, 4294901760
    %816 = vmatpush.msra.mxu0 %v815
    %v817 = vand.u32 %v130, 4294901760
    %818 = vmatpush.msra.mxu0 %v817
    %v819 = vand.u32 %v128, 4294901760
    %820 = vmatpush.msra.mxu0 %v819
    %v821 = vand.u32 %v126, 4294901760
    %822 = vmatpush.msra.mxu0 %v821
    %v823 = vand.u32 %v124, 4294901760
    %824 = vmatpush.msra.mxu0 %v823
    %v825 = vand.u32 %v122, 4294901760
    %826 = vmatpush.msra.mxu0 %v825
    %v827 = vand.u32 %v120, 4294901760
    %828 = vmatpush.msra.mxu0 %v827
    %v829 = vand.u32 %v118, 4294901760
    %830 = vmatpush.msra.mxu0 %v829
    %v831 = vand.u32 %v116, 4294901760
    %832 = vmatpush.msra.mxu0 %v831
    %v833 = vand.u32 %v114, 4294901760
    %834 = vmatpush.msra.mxu0 %v833
    %v835 = vand.u32 %v112, 4294901760
    %836 = vmatpush.msra.mxu0 %v835
    %v837 = vand.u32 %v110, 4294901760
    %838 = vmatpush.msra.mxu0 %v837
    %v839 = vand.u32 %v108, 4294901760
    %840 = vmatpush.msra.mxu0 %v839
    %v841 = vand.u32 %v106, 4294901760
    %842 = vmatpush.msra.mxu0 %v841
    %v843 = vand.u32 %v104, 4294901760
    %844 = vmatpush.msra.mxu0 %v843
    %v845 = vand.u32 %v102, 4294901760
    %846 = vmatpush.msra.mxu0 %v845
    %v847 = vand.u32 %v63, 4294901760
    %v848 = vsub.f32 %v63, %v847
    %v849 = vand.u32 %v848, 4294901760
    %850 = vmatmul.f32.gmra.mxu0 %v849
    %v851 = vpop.f32.mrf.mxu0
    %v852 = vadd.f32 %v798, %v851
    %v853 = vand.u32 %v65, 4294901760
    %v854 = vsub.f32 %v65, %v853
    %v855 = vand.u32 %v854, 4294901760
    %856 = vmatmul.f32.gmra.mxu0 %v855
    %v857 = vpop.f32.mrf.mxu0
    %v858 = vadd.f32 %v803, %v857
    %v859 = vand.u32 %v67, 4294901760
    %v860 = vsub.f32 %v67, %v859
    %v861 = vand.u32 %v860, 4294901760
    %862 = vmatmul.f32.gmra.mxu0 %v861
    %v863 = vpop.f32.mrf.mxu0
    %v864 = vadd.f32 %v808, %v863
    %v865 = vand.u32 %v69, 4294901760
    %v866 = vsub.f32 %v69, %v865
    %v867 = vand.u32 %v866, 4294901760
    %868 = vmatmul.f32.gmra.mxu0 %v867
    %v869 = vpop.f32.mrf.mxu0
    %v870 = vadd.f32 %v813, %v869
    %871 = vdwg.mxu0
    %v872 = vand.u32 %v132, 4294901760
    %v873 = vsub.f32 %v132, %v872
    %v874 = vand.u32 %v873, 4294901760
    %875 = vmatpush.msra.mxu0 %v874
    %v876 = vand.u32 %v130, 4294901760
    %v877 = vsub.f32 %v130, %v876
    %v878 = vand.u32 %v877, 4294901760
    %879 = vmatpush.msra.mxu0 %v878
    %v880 = vand.u32 %v128, 4294901760
    %v881 = vsub.f32 %v128, %v880
    %v882 = vand.u32 %v881, 4294901760
    %883 = vmatpush.msra.mxu0 %v882
    %v884 = vand.u32 %v126, 4294901760
    %v885 = vsub.f32 %v126, %v884
    %v886 = vand.u32 %v885, 4294901760
    %887 = vmatpush.msra.mxu0 %v886
    %v888 = vand.u32 %v124, 4294901760
    %v889 = vsub.f32 %v124, %v888
    %v890 = vand.u32 %v889, 4294901760
    %891 = vmatpush.msra.mxu0 %v890
    %v892 = vand.u32 %v122, 4294901760
    %v893 = vsub.f32 %v122, %v892
    %v894 = vand.u32 %v893, 4294901760
    %895 = vmatpush.msra.mxu0 %v894
    %v896 = vand.u32 %v120, 4294901760
    %v897 = vsub.f32 %v120, %v896
    %v898 = vand.u32 %v897, 4294901760
    %899 = vmatpush.msra.mxu0 %v898
    %v900 = vand.u32 %v118, 4294901760
    %v901 = vsub.f32 %v118, %v900
    %v902 = vand.u32 %v901, 4294901760
    %903 = vmatpush.msra.mxu0 %v902
    %v904 = vand.u32 %v116, 4294901760
    %v905 = vsub.f32 %v116, %v904
    %v906 = vand.u32 %v905, 4294901760
    %907 = vmatpush.msra.mxu0 %v906
    %v908 = vand.u32 %v114, 4294901760
    %v909 = vsub.f32 %v114, %v908
    %v910 = vand.u32 %v909, 4294901760
    %911 = vmatpush.msra.mxu0 %v910
    %v912 = vand.u32 %v112, 4294901760
    %v913 = vsub.f32 %v112, %v912
    %v914 = vand.u32 %v913, 4294901760
    %915 = vmatpush.msra.mxu0 %v914
    %v916 = vand.u32 %v110, 4294901760
    %v917 = vsub.f32 %v110, %v916
    %v918 = vand.u32 %v917, 4294901760
    %919 = vmatpush.msra.mxu0 %v918
    %v920 = vand.u32 %v108, 4294901760
    %v921 = vsub.f32 %v108, %v920
    %v922 = vand.u32 %v921, 4294901760
    %923 = vmatpush.msra.mxu0 %v922
    %v924 = vand.u32 %v106, 4294901760
    %v925 = vsub.f32 %v106, %v924
    %v926 = vand.u32 %v925, 4294901760
    %927 = vmatpush.msra.mxu0 %v926
    %v928 = vand.u32 %v104, 4294901760
    %v929 = vsub.f32 %v104, %v928
    %v930 = vand.u32 %v929, 4294901760
    %931 = vmatpush.msra.mxu0 %v930
    %v932 = vand.u32 %v102, 4294901760
    %v933 = vsub.f32 %v102, %v932
    %v934 = vand.u32 %v933, 4294901760
    %935 = vmatpush.msra.mxu0 %v934
    %v936 = vand.u32 %v63, 4294901760
    %937 = vmatmul.f32.gmra.mxu0 %v936
    %v938 = vpop.f32.mrf.mxu0
    %v939 = vadd.f32 %v852, %v938
    %v940 = vand.u32 %v65, 4294901760
    %941 = vmatmul.f32.gmra.mxu0 %v940
    %v942 = vpop.f32.mrf.mxu0
    %v943 = vadd.f32 %v858, %v942
    %v944 = vand.u32 %v67, 4294901760
    %945 = vmatmul.f32.gmra.mxu0 %v944
    %v946 = vpop.f32.mrf.mxu0
    %v947 = vadd.f32 %v864, %v946
    %v948 = vand.u32 %v69, 4294901760
    %949 = vmatmul.f32.gmra.mxu0 %v948
    %v950 = vpop.f32.mrf.mxu0
    %v951 = vadd.f32 %v870, %v950
    %952 = vdwg.mxu0
    %v953 = vand.u32 %v132, 4294901760
    %954 = vmatpush.msra.mxu0 %v953
    %v955 = vand.u32 %v130, 4294901760
    %956 = vmatpush.msra.mxu0 %v955
    %v957 = vand.u32 %v128, 4294901760
    %958 = vmatpush.msra.mxu0 %v957
    %v959 = vand.u32 %v126, 4294901760
    %960 = vmatpush.msra.mxu0 %v959
    %v961 = vand.u32 %v124, 4294901760
    %962 = vmatpush.msra.mxu0 %v961
    %v963 = vand.u32 %v122, 4294901760
    %964 = vmatpush.msra.mxu0 %v963
    %v965 = vand.u32 %v120, 4294901760
    %966 = vmatpush.msra.mxu0 %v965
    %v967 = vand.u32 %v118, 4294901760
    %968 = vmatpush.msra.mxu0 %v967
    %v969 = vand.u32 %v116, 4294901760
    %970 = vmatpush.msra.mxu0 %v969
    %v971 = vand.u32 %v114, 4294901760
    %972 = vmatpush.msra.mxu0 %v971
    %v973 = vand.u32 %v112, 4294901760
    %974 = vmatpush.msra.mxu0 %v973
    %v975 = vand.u32 %v110, 4294901760
    %976 = vmatpush.msra.mxu0 %v975
    %v977 = vand.u32 %v108, 4294901760
    %978 = vmatpush.msra.mxu0 %v977
    %v979 = vand.u32 %v106, 4294901760
    %980 = vmatpush.msra.mxu0 %v979
    %v981 = vand.u32 %v104, 4294901760
    %982 = vmatpush.msra.mxu0 %v981
    %v983 = vand.u32 %v102, 4294901760
    %984 = vmatpush.msra.mxu0 %v983
    %v985 = vand.u32 %v63, 4294901760
    %986 = vmatmul.f32.gmra.mxu0 %v985
    %v987 = vpop.f32.mrf.mxu0
    %v988 = vadd.f32 %v939, %v987
    %v989 = vand.u32 %v65, 4294901760
    %990 = vmatmul.f32.gmra.mxu0 %v989
    %v991 = vpop.f32.mrf.mxu0
    %v992 = vadd.f32 %v943, %v991
    %v993 = vand.u32 %v67, 4294901760
    %994 = vmatmul.f32.gmra.mxu0 %v993
    %v995 = vpop.f32.mrf.mxu0
    %v996 = vadd.f32 %v947, %v995
    %v997 = vand.u32 %v69, 4294901760
    %998 = vmatmul.f32.gmra.mxu0 %v997
    %v999 = vpop.f32.mrf.mxu0
    %v1000 = vadd.f32 %v951, %v999
    %1001 = vdwg.mxu0
    %v1002 = vand.u32 %v101, 4294901760
    %1003 = vmatpush.msra.mxu0 %v1002
    %v1004 = vand.u32 %v99, 4294901760
    %1005 = vmatpush.msra.mxu0 %v1004
    %v1006 = vand.u32 %v97, 4294901760
    %1007 = vmatpush.msra.mxu0 %v1006
    %v1008 = vand.u32 %v95, 4294901760
    %1009 = vmatpush.msra.mxu0 %v1008
    %v1010 = vand.u32 %v93, 4294901760
    %1011 = vmatpush.msra.mxu0 %v1010
    %v1012 = vand.u32 %v91, 4294901760
    %1013 = vmatpush.msra.mxu0 %v1012
    %v1014 = vand.u32 %v89, 4294901760
    %1015 = vmatpush.msra.mxu0 %v1014
    %v1016 = vand.u32 %v87, 4294901760
    %1017 = vmatpush.msra.mxu0 %v1016
    %v1018 = vand.u32 %v85, 4294901760
    %1019 = vmatpush.msra.mxu0 %v1018
    %v1020 = vand.u32 %v83, 4294901760
    %1021 = vmatpush.msra.mxu0 %v1020
    %v1022 = vand.u32 %v81, 4294901760
    %1023 = vmatpush.msra.mxu0 %v1022
    %v1024 = vand.u32 %v79, 4294901760
    %1025 = vmatpush.msra.mxu0 %v1024
    %v1026 = vand.u32 %v77, 4294901760
    %1027 = vmatpush.msra.mxu0 %v1026
    %v1028 = vand.u32 %v75, 4294901760
    %1029 = vmatpush.msra.mxu0 %v1028
    %v1030 = vand.u32 %v73, 4294901760
    %1031 = vmatpush.msra.mxu0 %v1030
    %v1032 = vand.u32 %v71, 4294901760
    %1033 = vmatpush.msra.mxu0 %v1032
    %v1034 = vand.u32 %v62, 4294901760
    %v1035 = vsub.f32 %v62, %v1034
    %v1036 = vand.u32 %v1035, 4294901760
    %v1037 = vsub.f32 %v1035, %v1036
    %v1038 = vand.u32 %v1037, 4294901760
    %1039 = vmatmul.f32.gmra.mxu0 %v1038
    %v1040 = vpop.f32.mrf.mxu0
    %v1041 = vadd.f32 0.0, %v1040
    %v1042 = vand.u32 %v64, 4294901760
    %v1043 = vsub.f32 %v64, %v1042
    %v1044 = vand.u32 %v1043, 4294901760
    %v1045 = vsub.f32 %v1043, %v1044
    %v1046 = vand.u32 %v1045, 4294901760
    %1047 = vmatmul.f32.gmra.mxu0 %v1046
    %v1048 = vpop.f32.mrf.mxu0
    %v1049 = vadd.f32 0.0, %v1048
    %v1050 = vand.u32 %v66, 4294901760
    %v1051 = vsub.f32 %v66, %v1050
    %v1052 = vand.u32 %v1051, 4294901760
    %v1053 = vsub.f32 %v1051, %v1052
    %v1054 = vand.u32 %v1053, 4294901760
    %1055 = vmatmul.f32.gmra.mxu0 %v1054
    %v1056 = vpop.f32.mrf.mxu0
    %v1057 = vadd.f32 0.0, %v1056
    %v1058 = vand.u32 %v68, 4294901760
    %v1059 = vsub.f32 %v68, %v1058
    %v1060 = vand.u32 %v1059, 4294901760
    %v1061 = vsub.f32 %v1059, %v1060
    %v1062 = vand.u32 %v1061, 4294901760
    %1063 = vmatmul.f32.gmra.mxu0 %v1062
    %v1064 = vpop.f32.mrf.mxu0
    %v1065 = vadd.f32 0.0, %v1064
    %1066 = vdwg.mxu0
    %v1067 = vand.u32 %v101, 4294901760
    %v1068 = vsub.f32 %v101, %v1067
    %v1069 = vand.u32 %v1068, 4294901760
    %v1070 = vsub.f32 %v1068, %v1069
    %v1071 = vand.u32 %v1070, 4294901760
    %1072 = vmatpush.msra.mxu0 %v1071
    %v1073 = vand.u32 %v99, 4294901760
    %v1074 = vsub.f32 %v99, %v1073
    %v1075 = vand.u32 %v1074, 4294901760
    %v1076 = vsub.f32 %v1074, %v1075
    %v1077 = vand.u32 %v1076, 4294901760
    %1078 = vmatpush.msra.mxu0 %v1077
    %v1079 = vand.u32 %v97, 4294901760
    %v1080 = vsub.f32 %v97, %v1079
    %v1081 = vand.u32 %v1080, 4294901760
    %v1082 = vsub.f32 %v1080, %v1081
    %v1083 = vand.u32 %v1082, 4294901760
    %1084 = vmatpush.msra.mxu0 %v1083
    %v1085 = vand.u32 %v95, 4294901760
    %v1086 = vsub.f32 %v95, %v1085
    %v1087 = vand.u32 %v1086, 4294901760
    %v1088 = vsub.f32 %v1086, %v1087
    %v1089 = vand.u32 %v1088, 4294901760
    %1090 = vmatpush.msra.mxu0 %v1089
    %v1091 = vand.u32 %v93, 4294901760
    %v1092 = vsub.f32 %v93, %v1091
    %v1093 = vand.u32 %v1092, 4294901760
    %v1094 = vsub.f32 %v1092, %v1093
    %v1095 = vand.u32 %v1094, 4294901760
    %1096 = vmatpush.msra.mxu0 %v1095
    %v1097 = vand.u32 %v91, 4294901760
    %v1098 = vsub.f32 %v91, %v1097
    %v1099 = vand.u32 %v1098, 4294901760
    %v1100 = vsub.f32 %v1098, %v1099
    %v1101 = vand.u32 %v1100, 4294901760
    %1102 = vmatpush.msra.mxu0 %v1101
    %v1103 = vand.u32 %v89, 4294901760
    %v1104 = vsub.f32 %v89, %v1103
    %v1105 = vand.u32 %v1104, 4294901760
    %v1106 = vsub.f32 %v1104, %v1105
    %v1107 = vand.u32 %v1106, 4294901760
    %1108 = vmatpush.msra.mxu0 %v1107
    %v1109 = vand.u32 %v87, 4294901760
    %v1110 = vsub.f32 %v87, %v1109
    %v1111 = vand.u32 %v1110, 4294901760
    %v1112 = vsub.f32 %v1110, %v1111
    %v1113 = vand.u32 %v1112, 4294901760
    %1114 = vmatpush.msra.mxu0 %v1113
    %v1115 = vand.u32 %v85, 4294901760
    %v1116 = vsub.f32 %v85, %v1115
    %v1117 = vand.u32 %v1116, 4294901760
    %v1118 = vsub.f32 %v1116, %v1117
    %v1119 = vand.u32 %v1118, 4294901760
    %1120 = vmatpush.msra.mxu0 %v1119
    %v1121 = vand.u32 %v83, 4294901760
    %v1122 = vsub.f32 %v83, %v1121
    %v1123 = vand.u32 %v1122, 4294901760
    %v1124 = vsub.f32 %v1122, %v1123
    %v1125 = vand.u32 %v1124, 4294901760
    %1126 = vmatpush.msra.mxu0 %v1125
    %v1127 = vand.u32 %v81, 4294901760
    %v1128 = vsub.f32 %v81, %v1127
    %v1129 = vand.u32 %v1128, 4294901760
    %v1130 = vsub.f32 %v1128, %v1129
    %v1131 = vand.u32 %v1130, 4294901760
    %1132 = vmatpush.msra.mxu0 %v1131
    %v1133 = vand.u32 %v79, 4294901760
    %v1134 = vsub.f32 %v79, %v1133
    %v1135 = vand.u32 %v1134, 4294901760
    %v1136 = vsub.f32 %v1134, %v1135
    %v1137 = vand.u32 %v1136, 4294901760
    %1138 = vmatpush.msra.mxu0 %v1137
    %v1139 = vand.u32 %v77, 4294901760
    %v1140 = vsub.f32 %v77, %v1139
    %v1141 = vand.u32 %v1140, 4294901760
    %v1142 = vsub.f32 %v1140, %v1141
    %v1143 = vand.u32 %v1142, 4294901760
    %1144 = vmatpush.msra.mxu0 %v1143
    %v1145 = vand.u32 %v75, 4294901760
    %v1146 = vsub.f32 %v75, %v1145
    %v1147 = vand.u32 %v1146, 4294901760
    %v1148 = vsub.f32 %v1146, %v1147
    %v1149 = vand.u32 %v1148, 4294901760
    %1150 = vmatpush.msra.mxu0 %v1149
    %v1151 = vand.u32 %v73, 4294901760
    %v1152 = vsub.f32 %v73, %v1151
    %v1153 = vand.u32 %v1152, 4294901760
    %v1154 = vsub.f32 %v1152, %v1153
    %v1155 = vand.u32 %v1154, 4294901760
    %1156 = vmatpush.msra.mxu0 %v1155
    %v1157 = vand.u32 %v71, 4294901760
    %v1158 = vsub.f32 %v71, %v1157
    %v1159 = vand.u32 %v1158, 4294901760
    %v1160 = vsub.f32 %v1158, %v1159
    %v1161 = vand.u32 %v1160, 4294901760
    %1162 = vmatpush.msra.mxu0 %v1161
    %v1163 = vand.u32 %v62, 4294901760
    %1164 = vmatmul.f32.gmra.mxu0 %v1163
    %v1165 = vpop.f32.mrf.mxu0
    %v1166 = vadd.f32 %v1041, %v1165
    %v1167 = vand.u32 %v64, 4294901760
    %1168 = vmatmul.f32.gmra.mxu0 %v1167
    %v1169 = vpop.f32.mrf.mxu0
    %v1170 = vadd.f32 %v1049, %v1169
    %v1171 = vand.u32 %v66, 4294901760
    %1172 = vmatmul.f32.gmra.mxu0 %v1171
    %v1173 = vpop.f32.mrf.mxu0
    %v1174 = vadd.f32 %v1057, %v1173
    %v1175 = vand.u32 %v68, 4294901760
    %1176 = vmatmul.f32.gmra.mxu0 %v1175
    %v1177 = vpop.f32.mrf.mxu0
    %v1178 = vadd.f32 %v1065, %v1177
    %1179 = vdwg.mxu0
    %v1180 = vand.u32 %v101, 4294901760
    %v1181 = vsub.f32 %v101, %v1180
    %1182 = vmatpush.msra.mxu0 %v1181
    %v1183 = vand.u32 %v99, 4294901760
    %v1184 = vsub.f32 %v99, %v1183
    %1185 = vmatpush.msra.mxu0 %v1184
    %v1186 = vand.u32 %v97, 4294901760
    %v1187 = vsub.f32 %v97, %v1186
    %1188 = vmatpush.msra.mxu0 %v1187
    %v1189 = vand.u32 %v95, 4294901760
    %v1190 = vsub.f32 %v95, %v1189
    %1191 = vmatpush.msra.mxu0 %v1190
    %v1192 = vand.u32 %v93, 4294901760
    %v1193 = vsub.f32 %v93, %v1192
    %1194 = vmatpush.msra.mxu0 %v1193
    %v1195 = vand.u32 %v91, 4294901760
    %v1196 = vsub.f32 %v91, %v1195
    %1197 = vmatpush.msra.mxu0 %v1196
    %v1198 = vand.u32 %v89, 4294901760
    %v1199 = vsub.f32 %v89, %v1198
    %1200 = vmatpush.msra.mxu0 %v1199
    %v1201 = vand.u32 %v87, 4294901760
    %v1202 = vsub.f32 %v87, %v1201
    %1203 = vmatpush.msra.mxu0 %v1202
    %v1204 = vand.u32 %v85, 4294901760
    %v1205 = vsub.f32 %v85, %v1204
    %1206 = vmatpush.msra.mxu0 %v1205
    %v1207 = vand.u32 %v83, 4294901760
    %v1208 = vsub.f32 %v83, %v1207
    %1209 = vmatpush.msra.mxu0 %v1208
    %v1210 = vand.u32 %v81, 4294901760
    %v1211 = vsub.f32 %v81, %v1210
    %1212 = vmatpush.msra.mxu0 %v1211
    %v1213 = vand.u32 %v79, 4294901760
    %v1214 = vsub.f32 %v79, %v1213
    %1215 = vmatpush.msra.mxu0 %v1214
    %v1216 = vand.u32 %v77, 4294901760
    %v1217 = vsub.f32 %v77, %v1216
    %1218 = vmatpush.msra.mxu0 %v1217
    %v1219 = vand.u32 %v75, 4294901760
    %v1220 = vsub.f32 %v75, %v1219
    %1221 = vmatpush.msra.mxu0 %v1220
    %v1222 = vand.u32 %v73, 4294901760
    %v1223 = vsub.f32 %v73, %v1222
    %1224 = vmatpush.msra.mxu0 %v1223
    %v1225 = vand.u32 %v71, 4294901760
    %v1226 = vsub.f32 %v71, %v1225
    %1227 = vmatpush.msra.mxu0 %v1226
    %v1228 = vand.u32 %v62, 4294901760
    %v1229 = vsub.f32 %v62, %v1228
    %1230 = vmatmul.f32.gmra.mxu0 %v1229
    %v1231 = vpop.f32.mrf.mxu0
    %v1232 = vadd.f32 %v1166, %v1231
    %v1233 = vand.u32 %v64, 4294901760
    %v1234 = vsub.f32 %v64, %v1233
    %1235 = vmatmul.f32.gmra.mxu0 %v1234
    %v1236 = vpop.f32.mrf.mxu0
    %v1237 = vadd.f32 %v1170, %v1236
    %v1238 = vand.u32 %v66, 4294901760
    %v1239 = vsub.f32 %v66, %v1238
    %1240 = vmatmul.f32.gmra.mxu0 %v1239
    %v1241 = vpop.f32.mrf.mxu0
    %v1242 = vadd.f32 %v1174, %v1241
    %v1243 = vand.u32 %v68, 4294901760
    %v1244 = vsub.f32 %v68, %v1243
    %1245 = vmatmul.f32.gmra.mxu0 %v1244
    %v1246 = vpop.f32.mrf.mxu0
    %v1247 = vadd.f32 %v1178, %v1246
    %1248 = vdwg.mxu0
    %v1249 = vand.u32 %v101, 4294901760
    %1250 = vmatpush.msra.mxu0 %v1249
    %v1251 = vand.u32 %v99, 4294901760
    %1252 = vmatpush.msra.mxu0 %v1251
    %v1253 = vand.u32 %v97, 4294901760
    %1254 = vmatpush.msra.mxu0 %v1253
    %v1255 = vand.u32 %v95, 4294901760
    %1256 = vmatpush.msra.mxu0 %v1255
    %v1257 = vand.u32 %v93, 4294901760
    %1258 = vmatpush.msra.mxu0 %v1257
    %v1259 = vand.u32 %v91, 4294901760
    %1260 = vmatpush.msra.mxu0 %v1259
    %v1261 = vand.u32 %v89, 4294901760
    %1262 = vmatpush.msra.mxu0 %v1261
    %v1263 = vand.u32 %v87, 4294901760
    %1264 = vmatpush.msra.mxu0 %v1263
    %v1265 = vand.u32 %v85, 4294901760
    %1266 = vmatpush.msra.mxu0 %v1265
    %v1267 = vand.u32 %v83, 4294901760
    %1268 = vmatpush.msra.mxu0 %v1267
    %v1269 = vand.u32 %v81, 4294901760
    %1270 = vmatpush.msra.mxu0 %v1269
    %v1271 = vand.u32 %v79, 4294901760
    %1272 = vmatpush.msra.mxu0 %v1271
    %v1273 = vand.u32 %v77, 4294901760
    %1274 = vmatpush.msra.mxu0 %v1273
    %v1275 = vand.u32 %v75, 4294901760
    %1276 = vmatpush.msra.mxu0 %v1275
    %v1277 = vand.u32 %v73, 4294901760
    %1278 = vmatpush.msra.mxu0 %v1277
    %v1279 = vand.u32 %v71, 4294901760
    %1280 = vmatpush.msra.mxu0 %v1279
    %v1281 = vand.u32 %v62, 4294901760
    %v1282 = vsub.f32 %v62, %v1281
    %v1283 = vand.u32 %v1282, 4294901760
    %1284 = vmatmul.f32.gmra.mxu0 %v1283
    %v1285 = vpop.f32.mrf.mxu0
    %v1286 = vadd.f32 %v1232, %v1285
    %v1287 = vand.u32 %v64, 4294901760
    %v1288 = vsub.f32 %v64, %v1287
    %v1289 = vand.u32 %v1288, 4294901760
    %1290 = vmatmul.f32.gmra.mxu0 %v1289
    %v1291 = vpop.f32.mrf.mxu0
    %v1292 = vadd.f32 %v1237, %v1291
    %v1293 = vand.u32 %v66, 4294901760
    %v1294 = vsub.f32 %v66, %v1293
    %v1295 = vand.u32 %v1294, 4294901760
    %1296 = vmatmul.f32.gmra.mxu0 %v1295
    %v1297 = vpop.f32.mrf.mxu0
    %v1298 = vadd.f32 %v1242, %v1297
    %v1299 = vand.u32 %v68, 4294901760
    %v1300 = vsub.f32 %v68, %v1299
    %v1301 = vand.u32 %v1300, 4294901760
    %1302 = vmatmul.f32.gmra.mxu0 %v1301
    %v1303 = vpop.f32.mrf.mxu0
    %v1304 = vadd.f32 %v1247, %v1303
    %1305 = vdwg.mxu0
    %v1306 = vand.u32 %v101, 4294901760
    %v1307 = vsub.f32 %v101, %v1306
    %v1308 = vand.u32 %v1307, 4294901760
    %1309 = vmatpush.msra.mxu0 %v1308
    %v1310 = vand.u32 %v99, 4294901760
    %v1311 = vsub.f32 %v99, %v1310
    %v1312 = vand.u32 %v1311, 4294901760
    %1313 = vmatpush.msra.mxu0 %v1312
    %v1314 = vand.u32 %v97, 4294901760
    %v1315 = vsub.f32 %v97, %v1314
    %v1316 = vand.u32 %v1315, 4294901760
    %1317 = vmatpush.msra.mxu0 %v1316
    %v1318 = vand.u32 %v95, 4294901760
    %v1319 = vsub.f32 %v95, %v1318
    %v1320 = vand.u32 %v1319, 4294901760
    %1321 = vmatpush.msra.mxu0 %v1320
    %v1322 = vand.u32 %v93, 4294901760
    %v1323 = vsub.f32 %v93, %v1322
    %v1324 = vand.u32 %v1323, 4294901760
    %1325 = vmatpush.msra.mxu0 %v1324
    %v1326 = vand.u32 %v91, 4294901760
    %v1327 = vsub.f32 %v91, %v1326
    %v1328 = vand.u32 %v1327, 4294901760
    %1329 = vmatpush.msra.mxu0 %v1328
    %v1330 = vand.u32 %v89, 4294901760
    %v1331 = vsub.f32 %v89, %v1330
    %v1332 = vand.u32 %v1331, 4294901760
    %1333 = vmatpush.msra.mxu0 %v1332
    %v1334 = vand.u32 %v87, 4294901760
    %v1335 = vsub.f32 %v87, %v1334
    %v1336 = vand.u32 %v1335, 4294901760
    %1337 = vmatpush.msra.mxu0 %v1336
    %v1338 = vand.u32 %v85, 4294901760
    %v1339 = vsub.f32 %v85, %v1338
    %v1340 = vand.u32 %v1339, 4294901760
    %1341 = vmatpush.msra.mxu0 %v1340
    %v1342 = vand.u32 %v83, 4294901760
    %v1343 = vsub.f32 %v83, %v1342
    %v1344 = vand.u32 %v1343, 4294901760
    %1345 = vmatpush.msra.mxu0 %v1344
    %v1346 = vand.u32 %v81, 4294901760
    %v1347 = vsub.f32 %v81, %v1346
    %v1348 = vand.u32 %v1347, 4294901760
    %1349 = vmatpush.msra.mxu0 %v1348
    %v1350 = vand.u32 %v79, 4294901760
    %v1351 = vsub.f32 %v79, %v1350
    %v1352 = vand.u32 %v1351, 4294901760
    %1353 = vmatpush.msra.mxu0 %v1352
    %v1354 = vand.u32 %v77, 4294901760
    %v1355 = vsub.f32 %v77, %v1354
    %v1356 = vand.u32 %v1355, 4294901760
    %1357 = vmatpush.msra.mxu0 %v1356
    %v1358 = vand.u32 %v75, 4294901760
    %v1359 = vsub.f32 %v75, %v1358
    %v1360 = vand.u32 %v1359, 4294901760
    %1361 = vmatpush.msra.mxu0 %v1360
    %v1362 = vand.u32 %v73, 4294901760
    %v1363 = vsub.f32 %v73, %v1362
    %v1364 = vand.u32 %v1363, 4294901760
    %1365 = vmatpush.msra.mxu0 %v1364
    %v1366 = vand.u32 %v71, 4294901760
    %v1367 = vsub.f32 %v71, %v1366
    %v1368 = vand.u32 %v1367, 4294901760
    %1369 = vmatpush.msra.mxu0 %v1368
    %v1370 = vand.u32 %v62, 4294901760
    %1371 = vmatmul.f32.gmra.mxu0 %v1370
    %v1372 = vpop.f32.mrf.mxu0
    %v1373 = vadd.f32 %v1286, %v1372
    %v1374 = vand.u32 %v64, 4294901760
    %1375 = vmatmul.f32.gmra.mxu0 %v1374
    %v1376 = vpop.f32.mrf.mxu0
    %v1377 = vadd.f32 %v1292, %v1376
    %v1378 = vand.u32 %v66, 4294901760
    %1379 = vmatmul.f32.gmra.mxu0 %v1378
    %v1380 = vpop.f32.mrf.mxu0
    %v1381 = vadd.f32 %v1298, %v1380
    %v1382 = vand.u32 %v68, 4294901760
    %1383 = vmatmul.f32.gmra.mxu0 %v1382
    %v1384 = vpop.f32.mrf.mxu0
    %v1385 = vadd.f32 %v1304, %v1384
    %1386 = vdwg.mxu0
    %v1387 = vand.u32 %v101, 4294901760
    %1388 = vmatpush.msra.mxu0 %v1387
    %v1389 = vand.u32 %v99, 4294901760
    %1390 = vmatpush.msra.mxu0 %v1389
    %v1391 = vand.u32 %v97, 4294901760
    %1392 = vmatpush.msra.mxu0 %v1391
    %v1393 = vand.u32 %v95, 4294901760
    %1394 = vmatpush.msra.mxu0 %v1393
    %v1395 = vand.u32 %v93, 4294901760
    %1396 = vmatpush.msra.mxu0 %v1395
    %v1397 = vand.u32 %v91, 4294901760
    %1398 = vmatpush.msra.mxu0 %v1397
    %v1399 = vand.u32 %v89, 4294901760
    %1400 = vmatpush.msra.mxu0 %v1399
    %v1401 = vand.u32 %v87, 4294901760
    %1402 = vmatpush.msra.mxu0 %v1401
    %v1403 = vand.u32 %v85, 4294901760
    %1404 = vmatpush.msra.mxu0 %v1403
    %v1405 = vand.u32 %v83, 4294901760
    %1406 = vmatpush.msra.mxu0 %v1405
    %v1407 = vand.u32 %v81, 4294901760
    %1408 = vmatpush.msra.mxu0 %v1407
    %v1409 = vand.u32 %v79, 4294901760
    %1410 = vmatpush.msra.mxu0 %v1409
    %v1411 = vand.u32 %v77, 4294901760
    %1412 = vmatpush.msra.mxu0 %v1411
    %v1413 = vand.u32 %v75, 4294901760
    %1414 = vmatpush.msra.mxu0 %v1413
    %v1415 = vand.u32 %v73, 4294901760
    %1416 = vmatpush.msra.mxu0 %v1415
    %v1417 = vand.u32 %v71, 4294901760
    %1418 = vmatpush.msra.mxu0 %v1417
    %v1419 = vand.u32 %v62, 4294901760
    %1420 = vmatmul.f32.gmra.mxu0 %v1419
    %v1421 = vpop.f32.mrf.mxu0
    %v1422 = vadd.f32 %v1373, %v1421
    %v1423 = vand.u32 %v64, 4294901760
    %1424 = vmatmul.f32.gmra.mxu0 %v1423
    %v1425 = vpop.f32.mrf.mxu0
    %v1426 = vadd.f32 %v1377, %v1425
    %v1427 = vand.u32 %v66, 4294901760
    %1428 = vmatmul.f32.gmra.mxu0 %v1427
    %v1429 = vpop.f32.mrf.mxu0
    %v1430 = vadd.f32 %v1381, %v1429
    %v1431 = vand.u32 %v68, 4294901760
    %1432 = vmatmul.f32.gmra.mxu0 %v1431
    %v1433 = vpop.f32.mrf.mxu0
    %v1434 = vadd.f32 %v1385, %v1433
    %1435 = vdwg.mxu0
    %v1436 = vand.u32 %v133, 4294901760
    %1437 = vmatpush.msra.mxu0 %v1436
    %v1438 = vand.u32 %v131, 4294901760
    %1439 = vmatpush.msra.mxu0 %v1438
    %v1440 = vand.u32 %v129, 4294901760
    %1441 = vmatpush.msra.mxu0 %v1440
    %v1442 = vand.u32 %v127, 4294901760
    %1443 = vmatpush.msra.mxu0 %v1442
    %v1444 = vand.u32 %v125, 4294901760
    %1445 = vmatpush.msra.mxu0 %v1444
    %v1446 = vand.u32 %v123, 4294901760
    %1447 = vmatpush.msra.mxu0 %v1446
    %v1448 = vand.u32 %v121, 4294901760
    %1449 = vmatpush.msra.mxu0 %v1448
    %v1450 = vand.u32 %v119, 4294901760
    %1451 = vmatpush.msra.mxu0 %v1450
    %v1452 = vand.u32 %v117, 4294901760
    %1453 = vmatpush.msra.mxu0 %v1452
    %v1454 = vand.u32 %v115, 4294901760
    %1455 = vmatpush.msra.mxu0 %v1454
    %v1456 = vand.u32 %v113, 4294901760
    %1457 = vmatpush.msra.mxu0 %v1456
    %v1458 = vand.u32 %v111, 4294901760
    %1459 = vmatpush.msra.mxu0 %v1458
    %v1460 = vand.u32 %v109, 4294901760
    %1461 = vmatpush.msra.mxu0 %v1460
    %v1462 = vand.u32 %v107, 4294901760
    %1463 = vmatpush.msra.mxu0 %v1462
    %v1464 = vand.u32 %v105, 4294901760
    %1465 = vmatpush.msra.mxu0 %v1464
    %v1466 = vand.u32 %v103, 4294901760
    %1467 = vmatpush.msra.mxu0 %v1466
    %v1468 = vand.u32 %v63, 4294901760
    %v1469 = vsub.f32 %v63, %v1468
    %v1470 = vand.u32 %v1469, 4294901760
    %v1471 = vsub.f32 %v1469, %v1470
    %v1472 = vand.u32 %v1471, 4294901760
    %1473 = vmatmul.f32.gmra.mxu0 %v1472
    %v1474 = vpop.f32.mrf.mxu0
    %v1475 = vadd.f32 %v1422, %v1474
    %v1476 = vand.u32 %v65, 4294901760
    %v1477 = vsub.f32 %v65, %v1476
    %v1478 = vand.u32 %v1477, 4294901760
    %v1479 = vsub.f32 %v1477, %v1478
    %v1480 = vand.u32 %v1479, 4294901760
    %1481 = vmatmul.f32.gmra.mxu0 %v1480
    %v1482 = vpop.f32.mrf.mxu0
    %v1483 = vadd.f32 %v1426, %v1482
    %v1484 = vand.u32 %v67, 4294901760
    %v1485 = vsub.f32 %v67, %v1484
    %v1486 = vand.u32 %v1485, 4294901760
    %v1487 = vsub.f32 %v1485, %v1486
    %v1488 = vand.u32 %v1487, 4294901760
    %1489 = vmatmul.f32.gmra.mxu0 %v1488
    %v1490 = vpop.f32.mrf.mxu0
    %v1491 = vadd.f32 %v1430, %v1490
    %v1492 = vand.u32 %v69, 4294901760
    %v1493 = vsub.f32 %v69, %v1492
    %v1494 = vand.u32 %v1493, 4294901760
    %v1495 = vsub.f32 %v1493, %v1494
    %v1496 = vand.u32 %v1495, 4294901760
    %1497 = vmatmul.f32.gmra.mxu0 %v1496
    %v1498 = vpop.f32.mrf.mxu0
    %v1499 = vadd.f32 %v1434, %v1498
    %1500 = vdwg.mxu0
    %v1501 = vand.u32 %v133, 4294901760
    %v1502 = vsub.f32 %v133, %v1501
    %v1503 = vand.u32 %v1502, 4294901760
    %v1504 = vsub.f32 %v1502, %v1503
    %v1505 = vand.u32 %v1504, 4294901760
    %1506 = vmatpush.msra.mxu0 %v1505
    %v1507 = vand.u32 %v131, 4294901760
    %v1508 = vsub.f32 %v131, %v1507
    %v1509 = vand.u32 %v1508, 4294901760
    %v1510 = vsub.f32 %v1508, %v1509
    %v1511 = vand.u32 %v1510, 4294901760
    %1512 = vmatpush.msra.mxu0 %v1511
    %v1513 = vand.u32 %v129, 4294901760
    %v1514 = vsub.f32 %v129, %v1513
    %v1515 = vand.u32 %v1514, 4294901760
    %v1516 = vsub.f32 %v1514, %v1515
    %v1517 = vand.u32 %v1516, 4294901760
    %1518 = vmatpush.msra.mxu0 %v1517
    %v1519 = vand.u32 %v127, 4294901760
    %v1520 = vsub.f32 %v127, %v1519
    %v1521 = vand.u32 %v1520, 4294901760
    %v1522 = vsub.f32 %v1520, %v1521
    %v1523 = vand.u32 %v1522, 4294901760
    %1524 = vmatpush.msra.mxu0 %v1523
    %v1525 = vand.u32 %v125, 4294901760
    %v1526 = vsub.f32 %v125, %v1525
    %v1527 = vand.u32 %v1526, 4294901760
    %v1528 = vsub.f32 %v1526, %v1527
    %v1529 = vand.u32 %v1528, 4294901760
    %1530 = vmatpush.msra.mxu0 %v1529
    %v1531 = vand.u32 %v123, 4294901760
    %v1532 = vsub.f32 %v123, %v1531
    %v1533 = vand.u32 %v1532, 4294901760
    %v1534 = vsub.f32 %v1532, %v1533
    %v1535 = vand.u32 %v1534, 4294901760
    %1536 = vmatpush.msra.mxu0 %v1535
    %v1537 = vand.u32 %v121, 4294901760
    %v1538 = vsub.f32 %v121, %v1537
    %v1539 = vand.u32 %v1538, 4294901760
    %v1540 = vsub.f32 %v1538, %v1539
    %v1541 = vand.u32 %v1540, 4294901760
    %1542 = vmatpush.msra.mxu0 %v1541
    %v1543 = vand.u32 %v119, 4294901760
    %v1544 = vsub.f32 %v119, %v1543
    %v1545 = vand.u32 %v1544, 4294901760
    %v1546 = vsub.f32 %v1544, %v1545
    %v1547 = vand.u32 %v1546, 4294901760
    %1548 = vmatpush.msra.mxu0 %v1547
    %v1549 = vand.u32 %v117, 4294901760
    %v1550 = vsub.f32 %v117, %v1549
    %v1551 = vand.u32 %v1550, 4294901760
    %v1552 = vsub.f32 %v1550, %v1551
    %v1553 = vand.u32 %v1552, 4294901760
    %1554 = vmatpush.msra.mxu0 %v1553
    %v1555 = vand.u32 %v115, 4294901760
    %v1556 = vsub.f32 %v115, %v1555
    %v1557 = vand.u32 %v1556, 4294901760
    %v1558 = vsub.f32 %v1556, %v1557
    %v1559 = vand.u32 %v1558, 4294901760
    %1560 = vmatpush.msra.mxu0 %v1559
    %v1561 = vand.u32 %v113, 4294901760
    %v1562 = vsub.f32 %v113, %v1561
    %v1563 = vand.u32 %v1562, 4294901760
    %v1564 = vsub.f32 %v1562, %v1563
    %v1565 = vand.u32 %v1564, 4294901760
    %1566 = vmatpush.msra.mxu0 %v1565
    %v1567 = vand.u32 %v111, 4294901760
    %v1568 = vsub.f32 %v111, %v1567
    %v1569 = vand.u32 %v1568, 4294901760
    %v1570 = vsub.f32 %v1568, %v1569
    %v1571 = vand.u32 %v1570, 4294901760
    %1572 = vmatpush.msra.mxu0 %v1571
    %v1573 = vand.u32 %v109, 4294901760
    %v1574 = vsub.f32 %v109, %v1573
    %v1575 = vand.u32 %v1574, 4294901760
    %v1576 = vsub.f32 %v1574, %v1575
    %v1577 = vand.u32 %v1576, 4294901760
    %1578 = vmatpush.msra.mxu0 %v1577
    %v1579 = vand.u32 %v107, 4294901760
    %v1580 = vsub.f32 %v107, %v1579
    %v1581 = vand.u32 %v1580, 4294901760
    %v1582 = vsub.f32 %v1580, %v1581
    %v1583 = vand.u32 %v1582, 4294901760
    %1584 = vmatpush.msra.mxu0 %v1583
    %v1585 = vand.u32 %v105, 4294901760
    %v1586 = vsub.f32 %v105, %v1585
    %v1587 = vand.u32 %v1586, 4294901760
    %v1588 = vsub.f32 %v1586, %v1587
    %v1589 = vand.u32 %v1588, 4294901760
    %1590 = vmatpush.msra.mxu0 %v1589
    %v1591 = vand.u32 %v103, 4294901760
    %v1592 = vsub.f32 %v103, %v1591
    %v1593 = vand.u32 %v1592, 4294901760
    %v1594 = vsub.f32 %v1592, %v1593
    %v1595 = vand.u32 %v1594, 4294901760
    %1596 = vmatpush.msra.mxu0 %v1595
    %v1597 = vand.u32 %v63, 4294901760
    %1598 = vmatmul.f32.gmra.mxu0 %v1597
    %v1599 = vpop.f32.mrf.mxu0
    %v1600 = vadd.f32 %v1475, %v1599
    %v1601 = vand.u32 %v65, 4294901760
    %1602 = vmatmul.f32.gmra.mxu0 %v1601
    %v1603 = vpop.f32.mrf.mxu0
    %v1604 = vadd.f32 %v1483, %v1603
    %v1605 = vand.u32 %v67, 4294901760
    %1606 = vmatmul.f32.gmra.mxu0 %v1605
    %v1607 = vpop.f32.mrf.mxu0
    %v1608 = vadd.f32 %v1491, %v1607
    %v1609 = vand.u32 %v69, 4294901760
    %1610 = vmatmul.f32.gmra.mxu0 %v1609
    %v1611 = vpop.f32.mrf.mxu0
    %v1612 = vadd.f32 %v1499, %v1611
    %1613 = vdwg.mxu0
    %v1614 = vand.u32 %v133, 4294901760
    %v1615 = vsub.f32 %v133, %v1614
    %1616 = vmatpush.msra.mxu0 %v1615
    %v1617 = vand.u32 %v131, 4294901760
    %v1618 = vsub.f32 %v131, %v1617
    %1619 = vmatpush.msra.mxu0 %v1618
    %v1620 = vand.u32 %v129, 4294901760
    %v1621 = vsub.f32 %v129, %v1620
    %1622 = vmatpush.msra.mxu0 %v1621
    %v1623 = vand.u32 %v127, 4294901760
    %v1624 = vsub.f32 %v127, %v1623
    %1625 = vmatpush.msra.mxu0 %v1624
    %v1626 = vand.u32 %v125, 4294901760
    %v1627 = vsub.f32 %v125, %v1626
    %1628 = vmatpush.msra.mxu0 %v1627
    %v1629 = vand.u32 %v123, 4294901760
    %v1630 = vsub.f32 %v123, %v1629
    %1631 = vmatpush.msra.mxu0 %v1630
    %v1632 = vand.u32 %v121, 4294901760
    %v1633 = vsub.f32 %v121, %v1632
    %1634 = vmatpush.msra.mxu0 %v1633
    %v1635 = vand.u32 %v119, 4294901760
    %v1636 = vsub.f32 %v119, %v1635
    %1637 = vmatpush.msra.mxu0 %v1636
    %v1638 = vand.u32 %v117, 4294901760
    %v1639 = vsub.f32 %v117, %v1638
    %1640 = vmatpush.msra.mxu0 %v1639
    %v1641 = vand.u32 %v115, 4294901760
    %v1642 = vsub.f32 %v115, %v1641
    %1643 = vmatpush.msra.mxu0 %v1642
    %v1644 = vand.u32 %v113, 4294901760
    %v1645 = vsub.f32 %v113, %v1644
    %1646 = vmatpush.msra.mxu0 %v1645
    %v1647 = vand.u32 %v111, 4294901760
    %v1648 = vsub.f32 %v111, %v1647
    %1649 = vmatpush.msra.mxu0 %v1648
    %v1650 = vand.u32 %v109, 4294901760
    %v1651 = vsub.f32 %v109, %v1650
    %1652 = vmatpush.msra.mxu0 %v1651
    %v1653 = vand.u32 %v107, 4294901760
    %v1654 = vsub.f32 %v107, %v1653
    %1655 = vmatpush.msra.mxu0 %v1654
    %v1656 = vand.u32 %v105, 4294901760
    %v1657 = vsub.f32 %v105, %v1656
    %1658 = vmatpush.msra.mxu0 %v1657
    %v1659 = vand.u32 %v103, 4294901760
    %v1660 = vsub.f32 %v103, %v1659
    %1661 = vmatpush.msra.mxu0 %v1660
    %v1662 = vand.u32 %v63, 4294901760
    %v1663 = vsub.f32 %v63, %v1662
    %1664 = vmatmul.f32.gmra.mxu0 %v1663
    %v1665 = vpop.f32.mrf.mxu0
    %v1666 = vadd.f32 %v1600, %v1665
    %v1667 = vand.u32 %v65, 4294901760
    %v1668 = vsub.f32 %v65, %v1667
    %1669 = vmatmul.f32.gmra.mxu0 %v1668
    %v1670 = vpop.f32.mrf.mxu0
    %v1671 = vadd.f32 %v1604, %v1670
    %v1672 = vand.u32 %v67, 4294901760
    %v1673 = vsub.f32 %v67, %v1672
    %1674 = vmatmul.f32.gmra.mxu0 %v1673
    %v1675 = vpop.f32.mrf.mxu0
    %v1676 = vadd.f32 %v1608, %v1675
    %v1677 = vand.u32 %v69, 4294901760
    %v1678 = vsub.f32 %v69, %v1677
    %1679 = vmatmul.f32.gmra.mxu0 %v1678
    %v1680 = vpop.f32.mrf.mxu0
    %v1681 = vadd.f32 %v1612, %v1680
    %1682 = vdwg.mxu0
    %v1683 = vand.u32 %v133, 4294901760
    %1684 = vmatpush.msra.mxu0 %v1683
    %v1685 = vand.u32 %v131, 4294901760
    %1686 = vmatpush.msra.mxu0 %v1685
    %v1687 = vand.u32 %v129, 4294901760
    %1688 = vmatpush.msra.mxu0 %v1687
    %v1689 = vand.u32 %v127, 4294901760
    %1690 = vmatpush.msra.mxu0 %v1689
    %v1691 = vand.u32 %v125, 4294901760
    %1692 = vmatpush.msra.mxu0 %v1691
    %v1693 = vand.u32 %v123, 4294901760
    %1694 = vmatpush.msra.mxu0 %v1693
    %v1695 = vand.u32 %v121, 4294901760
    %1696 = vmatpush.msra.mxu0 %v1695
    %v1697 = vand.u32 %v119, 4294901760
    %1698 = vmatpush.msra.mxu0 %v1697
    %v1699 = vand.u32 %v117, 4294901760
    %1700 = vmatpush.msra.mxu0 %v1699
    %v1701 = vand.u32 %v115, 4294901760
    %1702 = vmatpush.msra.mxu0 %v1701
    %v1703 = vand.u32 %v113, 4294901760
    %1704 = vmatpush.msra.mxu0 %v1703
    %v1705 = vand.u32 %v111, 4294901760
    %1706 = vmatpush.msra.mxu0 %v1705
    %v1707 = vand.u32 %v109, 4294901760
    %1708 = vmatpush.msra.mxu0 %v1707
    %v1709 = vand.u32 %v107, 4294901760
    %1710 = vmatpush.msra.mxu0 %v1709
    %v1711 = vand.u32 %v105, 4294901760
    %1712 = vmatpush.msra.mxu0 %v1711
    %v1713 = vand.u32 %v103, 4294901760
    %1714 = vmatpush.msra.mxu0 %v1713
    %v1715 = vand.u32 %v63, 4294901760
    %v1716 = vsub.f32 %v63, %v1715
    %v1717 = vand.u32 %v1716, 4294901760
    %1718 = vmatmul.f32.gmra.mxu0 %v1717
    %v1719 = vpop.f32.mrf.mxu0
    %v1720 = vadd.f32 %v1666, %v1719
    %v1721 = vand.u32 %v65, 4294901760
    %v1722 = vsub.f32 %v65, %v1721
    %v1723 = vand.u32 %v1722, 4294901760
    %1724 = vmatmul.f32.gmra.mxu0 %v1723
    %v1725 = vpop.f32.mrf.mxu0
    %v1726 = vadd.f32 %v1671, %v1725
    %v1727 = vand.u32 %v67, 4294901760
    %v1728 = vsub.f32 %v67, %v1727
    %v1729 = vand.u32 %v1728, 4294901760
    %1730 = vmatmul.f32.gmra.mxu0 %v1729
    %v1731 = vpop.f32.mrf.mxu0
    %v1732 = vadd.f32 %v1676, %v1731
    %v1733 = vand.u32 %v69, 4294901760
    %v1734 = vsub.f32 %v69, %v1733
    %v1735 = vand.u32 %v1734, 4294901760
    %1736 = vmatmul.f32.gmra.mxu0 %v1735
    %v1737 = vpop.f32.mrf.mxu0
    %v1738 = vadd.f32 %v1681, %v1737
    %1739 = vdwg.mxu0
    %v1740 = vand.u32 %v133, 4294901760
    %v1741 = vsub.f32 %v133, %v1740
    %v1742 = vand.u32 %v1741, 4294901760
    %1743 = vmatpush.msra.mxu0 %v1742
    %v1744 = vand.u32 %v131, 4294901760
    %v1745 = vsub.f32 %v131, %v1744
    %v1746 = vand.u32 %v1745, 4294901760
    %1747 = vmatpush.msra.mxu0 %v1746
    %v1748 = vand.u32 %v129, 4294901760
    %v1749 = vsub.f32 %v129, %v1748
    %v1750 = vand.u32 %v1749, 4294901760
    %1751 = vmatpush.msra.mxu0 %v1750
    %v1752 = vand.u32 %v127, 4294901760
    %v1753 = vsub.f32 %v127, %v1752
    %v1754 = vand.u32 %v1753, 4294901760
    %1755 = vmatpush.msra.mxu0 %v1754
    %v1756 = vand.u32 %v125, 4294901760
    %v1757 = vsub.f32 %v125, %v1756
    %v1758 = vand.u32 %v1757, 4294901760
    %1759 = vmatpush.msra.mxu0 %v1758
    %v1760 = vand.u32 %v123, 4294901760
    %v1761 = vsub.f32 %v123, %v1760
    %v1762 = vand.u32 %v1761, 4294901760
    %1763 = vmatpush.msra.mxu0 %v1762
    %v1764 = vand.u32 %v121, 4294901760
    %v1765 = vsub.f32 %v121, %v1764
    %v1766 = vand.u32 %v1765, 4294901760
    %1767 = vmatpush.msra.mxu0 %v1766
    %v1768 = vand.u32 %v119, 4294901760
    %v1769 = vsub.f32 %v119, %v1768
    %v1770 = vand.u32 %v1769, 4294901760
    %1771 = vmatpush.msra.mxu0 %v1770
    %v1772 = vand.u32 %v117, 4294901760
    %v1773 = vsub.f32 %v117, %v1772
    %v1774 = vand.u32 %v1773, 4294901760
    %1775 = vmatpush.msra.mxu0 %v1774
    %v1776 = vand.u32 %v115, 4294901760
    %v1777 = vsub.f32 %v115, %v1776
    %v1778 = vand.u32 %v1777, 4294901760
    %1779 = vmatpush.msra.mxu0 %v1778
    %v1780 = vand.u32 %v113, 4294901760
    %v1781 = vsub.f32 %v113, %v1780
    %v1782 = vand.u32 %v1781, 4294901760
    %1783 = vmatpush.msra.mxu0 %v1782
    %v1784 = vand.u32 %v111, 4294901760
    %v1785 = vsub.f32 %v111, %v1784
    %v1786 = vand.u32 %v1785, 4294901760
    %1787 = vmatpush.msra.mxu0 %v1786
    %v1788 = vand.u32 %v109, 4294901760
    %v1789 = vsub.f32 %v109, %v1788
    %v1790 = vand.u32 %v1789, 4294901760
    %1791 = vmatpush.msra.mxu0 %v1790
    %v1792 = vand.u32 %v107, 4294901760
    %v1793 = vsub.f32 %v107, %v1792
    %v1794 = vand.u32 %v1793, 4294901760
    %1795 = vmatpush.msra.mxu0 %v1794
    %v1796 = vand.u32 %v105, 4294901760
    %v1797 = vsub.f32 %v105, %v1796
    %v1798 = vand.u32 %v1797, 4294901760
    %1799 = vmatpush.msra.mxu0 %v1798
    %v1800 = vand.u32 %v103, 4294901760
    %v1801 = vsub.f32 %v103, %v1800
    %v1802 = vand.u32 %v1801, 4294901760
    %1803 = vmatpush.msra.mxu0 %v1802
    %v1804 = vand.u32 %v63, 4294901760
    %1805 = vmatmul.f32.gmra.mxu0 %v1804
    %v1806 = vpop.f32.mrf.mxu0
    %v1807 = vadd.f32 %v1720, %v1806
    %v1808 = vand.u32 %v65, 4294901760
    %1809 = vmatmul.f32.gmra.mxu0 %v1808
    %v1810 = vpop.f32.mrf.mxu0
    %v1811 = vadd.f32 %v1726, %v1810
    %v1812 = vand.u32 %v67, 4294901760
    %1813 = vmatmul.f32.gmra.mxu0 %v1812
    %v1814 = vpop.f32.mrf.mxu0
    %v1815 = vadd.f32 %v1732, %v1814
    %v1816 = vand.u32 %v69, 4294901760
    %1817 = vmatmul.f32.gmra.mxu0 %v1816
    %v1818 = vpop.f32.mrf.mxu0
    %v1819 = vadd.f32 %v1738, %v1818
    %1820 = vdwg.mxu0
    %v1821 = vand.u32 %v133, 4294901760
    %1822 = vmatpush.msra.mxu0 %v1821
    %v1823 = vand.u32 %v131, 4294901760
    %1824 = vmatpush.msra.mxu0 %v1823
    %v1825 = vand.u32 %v129, 4294901760
    %1826 = vmatpush.msra.mxu0 %v1825
    %v1827 = vand.u32 %v127, 4294901760
    %1828 = vmatpush.msra.mxu0 %v1827
    %v1829 = vand.u32 %v125, 4294901760
    %1830 = vmatpush.msra.mxu0 %v1829
    %v1831 = vand.u32 %v123, 4294901760
    %1832 = vmatpush.msra.mxu0 %v1831
    %v1833 = vand.u32 %v121, 4294901760
    %1834 = vmatpush.msra.mxu0 %v1833
    %v1835 = vand.u32 %v119, 4294901760
    %1836 = vmatpush.msra.mxu0 %v1835
    %v1837 = vand.u32 %v117, 4294901760
    %1838 = vmatpush.msra.mxu0 %v1837
    %v1839 = vand.u32 %v115, 4294901760
    %1840 = vmatpush.msra.mxu0 %v1839
    %v1841 = vand.u32 %v113, 4294901760
    %1842 = vmatpush.msra.mxu0 %v1841
    %v1843 = vand.u32 %v111, 4294901760
    %1844 = vmatpush.msra.mxu0 %v1843
    %v1845 = vand.u32 %v109, 4294901760
    %1846 = vmatpush.msra.mxu0 %v1845
    %v1847 = vand.u32 %v107, 4294901760
    %1848 = vmatpush.msra.mxu0 %v1847
    %v1849 = vand.u32 %v105, 4294901760
    %1850 = vmatpush.msra.mxu0 %v1849
    %v1851 = vand.u32 %v103, 4294901760
    %1852 = vmatpush.msra.mxu0 %v1851
    %v1853 = vand.u32 %v63, 4294901760
    %1854 = vmatmul.f32.gmra.mxu0 %v1853
    %v1855 = vpop.f32.mrf.mxu0
    %v1856 = vadd.f32 %v1807, %v1855
    %v1857 = vand.u32 %v65, 4294901760
    %1858 = vmatmul.f32.gmra.mxu0 %v1857
    %v1859 = vpop.f32.mrf.mxu0
    %v1860 = vadd.f32 %v1811, %v1859
    %v1861 = vand.u32 %v67, 4294901760
    %1862 = vmatmul.f32.gmra.mxu0 %v1861
    %v1863 = vpop.f32.mrf.mxu0
    %v1864 = vadd.f32 %v1815, %v1863
    %v1865 = vand.u32 %v69, 4294901760
    %1866 = vmatmul.f32.gmra.mxu0 %v1865
    %v1867 = vpop.f32.mrf.mxu0
    %v1868 = vadd.f32 %v1819, %v1867
    %1869 = vdwg.mxu0
    %v1870 = vld [vmem:[#allocation7] sm:$0xff]
    %v1871 = vld [vmem:[#allocation7 + $0x8] sm:$0xff]
    %v1872 = vld [vmem:[#allocation7 + $0x10] sm:$0xff]
    %v1873 = vld [vmem:[#allocation7 + $0x18] sm:$0xff]
    %vm1874 = vcmask 261120
    %v1876 = vsel %vm1874, %v1870, 0
    %v1879 = vsel %vm1874, %v1871, 0
    %v1882 = vsel %vm1874, %v1872, 0
    %v1885 = vsel %vm1874, %v1873, 0
    %1887 = vmatpush.msra.mxu0 0.0
    %1888 = vmatpush.msra.mxu0 0.0
    %1889 = vmatpush.msra.mxu0 0.0
    %1890 = vmatpush.msra.mxu0 0.0
    %1891 = vmatpush.msra.mxu0 0.0
    %1892 = vmatpush.msra.mxu0 0.0
    %1893 = vmatpush.msra.mxu0 0.0
    %1894 = vmatpush.msra.mxu0 0.0
    %1895 = vmatpush.msra.mxu0 0.0
    %1896 = vmatpush.msra.mxu0 0.0
    %1897 = vmatpush.msra.mxu0 0.0
    %1898 = vmatpush.msra.mxu0 0.0
    %v1899 = vand.u32 %v1000, 4294901760
    %1900 = vmatpush.msra.mxu0 %v1899
    %v1901 = vand.u32 %v996, 4294901760
    %1902 = vmatpush.msra.mxu0 %v1901
    %v1903 = vand.u32 %v992, 4294901760
    %1904 = vmatpush.msra.mxu0 %v1903
    %v1905 = vand.u32 %v988, 4294901760
    %1906 = vmatpush.msra.mxu0 %v1905
    %v1907 = vand.u32 %v1876, 4294901760
    %v1908 = vsub.f32 %v1876, %v1907
    %v1909 = vand.u32 %v1908, 4294901760
    %v1910 = vsub.f32 %v1908, %v1909
    %v1911 = vand.u32 %v1910, 4294901760
    %1912 = vmatmul.f32.gmra.mxu0 %v1911
    %v1913 = vpop.f32.mrf.mxu0
    %v1914 = vadd.f32 0.0, %v1913
    %v1915 = vand.u32 %v1879, 4294901760
    %v1916 = vsub.f32 %v1879, %v1915
    %v1917 = vand.u32 %v1916, 4294901760
    %v1918 = vsub.f32 %v1916, %v1917
    %v1919 = vand.u32 %v1918, 4294901760
    %1920 = vmatmul.f32.gmra.mxu0 %v1919
    %v1921 = vpop.f32.mrf.mxu0
    %v1922 = vadd.f32 0.0, %v1921
    %v1923 = vand.u32 %v1882, 4294901760
    %v1924 = vsub.f32 %v1882, %v1923
    %v1925 = vand.u32 %v1924, 4294901760
    %v1926 = vsub.f32 %v1924, %v1925
    %v1927 = vand.u32 %v1926, 4294901760
    %1928 = vmatmul.f32.gmra.mxu0 %v1927
    %v1929 = vpop.f32.mrf.mxu0
    %v1930 = vadd.f32 0.0, %v1929
    %v1931 = vand.u32 %v1885, 4294901760
    %v1932 = vsub.f32 %v1885, %v1931
    %v1933 = vand.u32 %v1932, 4294901760
    %v1934 = vsub.f32 %v1932, %v1933
    %v1935 = vand.u32 %v1934, 4294901760
    %1936 = vmatmul.f32.gmra.mxu0 %v1935
    %v1937 = vpop.f32.mrf.mxu0
    %v1938 = vadd.f32 0.0, %v1937
    %1939 = vdwg.mxu0
    %1940 = vmatpush.msra.mxu0 0.0
    %1941 = vmatpush.msra.mxu0 0.0
    %1942 = vmatpush.msra.mxu0 0.0
    %1943 = vmatpush.msra.mxu0 0.0
    %1944 = vmatpush.msra.mxu0 0.0
    %1945 = vmatpush.msra.mxu0 0.0
    %1946 = vmatpush.msra.mxu0 0.0
    %1947 = vmatpush.msra.mxu0 0.0
    %1948 = vmatpush.msra.mxu0 0.0
    %1949 = vmatpush.msra.mxu0 0.0
    %1950 = vmatpush.msra.mxu0 0.0
    %1951 = vmatpush.msra.mxu0 0.0
    %v1952 = vand.u32 %v1000, 4294901760
    %v1953 = vsub.f32 %v1000, %v1952
    %v1954 = vand.u32 %v1953, 4294901760
    %v1955 = vsub.f32 %v1953, %v1954
    %v1956 = vand.u32 %v1955, 4294901760
    %1957 = vmatpush.msra.mxu0 %v1956
    %v1958 = vand.u32 %v996, 4294901760
    %v1959 = vsub.f32 %v996, %v1958
    %v1960 = vand.u32 %v1959, 4294901760
    %v1961 = vsub.f32 %v1959, %v1960
    %v1962 = vand.u32 %v1961, 4294901760
    %1963 = vmatpush.msra.mxu0 %v1962
    %v1964 = vand.u32 %v992, 4294901760
    %v1965 = vsub.f32 %v992, %v1964
    %v1966 = vand.u32 %v1965, 4294901760
    %v1967 = vsub.f32 %v1965, %v1966
    %v1968 = vand.u32 %v1967, 4294901760
    %1969 = vmatpush.msra.mxu0 %v1968
    %v1970 = vand.u32 %v988, 4294901760
    %v1971 = vsub.f32 %v988, %v1970
    %v1972 = vand.u32 %v1971, 4294901760
    %v1973 = vsub.f32 %v1971, %v1972
    %v1974 = vand.u32 %v1973, 4294901760
    %1975 = vmatpush.msra.mxu0 %v1974
    %v1976 = vand.u32 %v1876, 4294901760
    %1977 = vmatmul.f32.gmra.mxu0 %v1976
    %v1978 = vpop.f32.mrf.mxu0
    %v1979 = vadd.f32 %v1914, %v1978
    %v1980 = vand.u32 %v1879, 4294901760
    %1981 = vmatmul.f32.gmra.mxu0 %v1980
    %v1982 = vpop.f32.mrf.mxu0
    %v1983 = vadd.f32 %v1922, %v1982
    %v1984 = vand.u32 %v1882, 4294901760
    %1985 = vmatmul.f32.gmra.mxu0 %v1984
    %v1986 = vpop.f32.mrf.mxu0
    %v1987 = vadd.f32 %v1930, %v1986
    %v1988 = vand.u32 %v1885, 4294901760
    %1989 = vmatmul.f32.gmra.mxu0 %v1988
    %v1990 = vpop.f32.mrf.mxu0
    %v1991 = vadd.f32 %v1938, %v1990
    %1992 = vdwg.mxu0
    %1993 = vmatpush.msra.mxu0 0.0
    %1994 = vmatpush.msra.mxu0 0.0
    %1995 = vmatpush.msra.mxu0 0.0
    %1996 = vmatpush.msra.mxu0 0.0
    %1997 = vmatpush.msra.mxu0 0.0
    %1998 = vmatpush.msra.mxu0 0.0
    %1999 = vmatpush.msra.mxu0 0.0
    %2000 = vmatpush.msra.mxu0 0.0
    %2001 = vmatpush.msra.mxu0 0.0
    %2002 = vmatpush.msra.mxu0 0.0
    %2003 = vmatpush.msra.mxu0 0.0
    %2004 = vmatpush.msra.mxu0 0.0
    %v2005 = vand.u32 %v1000, 4294901760
    %v2006 = vsub.f32 %v1000, %v2005
    %2007 = vmatpush.msra.mxu0 %v2006
    %v2008 = vand.u32 %v996, 4294901760
    %v2009 = vsub.f32 %v996, %v2008
    %2010 = vmatpush.msra.mxu0 %v2009
    %v2011 = vand.u32 %v992, 4294901760
    %v2012 = vsub.f32 %v992, %v2011
    %2013 = vmatpush.msra.mxu0 %v2012
    %v2014 = vand.u32 %v988, 4294901760
    %v2015 = vsub.f32 %v988, %v2014
    %2016 = vmatpush.msra.mxu0 %v2015
    %v2017 = vand.u32 %v1876, 4294901760
    %v2018 = vsub.f32 %v1876, %v2017
    %2019 = vmatmul.f32.gmra.mxu0 %v2018
    %v2020 = vpop.f32.mrf.mxu0
    %v2021 = vadd.f32 %v1979, %v2020
    %v2022 = vand.u32 %v1879, 4294901760
    %v2023 = vsub.f32 %v1879, %v2022
    %2024 = vmatmul.f32.gmra.mxu0 %v2023
    %v2025 = vpop.f32.mrf.mxu0
    %v2026 = vadd.f32 %v1983, %v2025
    %v2027 = vand.u32 %v1882, 4294901760
    %v2028 = vsub.f32 %v1882, %v2027
    %2029 = vmatmul.f32.gmra.mxu0 %v2028
    %v2030 = vpop.f32.mrf.mxu0
    %v2031 = vadd.f32 %v1987, %v2030
    %v2032 = vand.u32 %v1885, 4294901760
    %v2033 = vsub.f32 %v1885, %v2032
    %2034 = vmatmul.f32.gmra.mxu0 %v2033
    %v2035 = vpop.f32.mrf.mxu0
    %v2036 = vadd.f32 %v1991, %v2035
    %2037 = vdwg.mxu0
    %2038 = vmatpush.msra.mxu0 0.0
    %2039 = vmatpush.msra.mxu0 0.0
    %2040 = vmatpush.msra.mxu0 0.0
    %2041 = vmatpush.msra.mxu0 0.0
    %2042 = vmatpush.msra.mxu0 0.0
    %2043 = vmatpush.msra.mxu0 0.0
    %2044 = vmatpush.msra.mxu0 0.0
    %2045 = vmatpush.msra.mxu0 0.0
    %2046 = vmatpush.msra.mxu0 0.0
    %2047 = vmatpush.msra.mxu0 0.0
    %2048 = vmatpush.msra.mxu0 0.0
    %2049 = vmatpush.msra.mxu0 0.0
    %v2050 = vand.u32 %v1000, 4294901760
    %2051 = vmatpush.msra.mxu0 %v2050
    %v2052 = vand.u32 %v996, 4294901760
    %2053 = vmatpush.msra.mxu0 %v2052
    %v2054 = vand.u32 %v992, 4294901760
    %2055 = vmatpush.msra.mxu0 %v2054
    %v2056 = vand.u32 %v988, 4294901760
    %2057 = vmatpush.msra.mxu0 %v2056
    %v2058 = vand.u32 %v1876, 4294901760
    %v2059 = vsub.f32 %v1876, %v2058
    %v2060 = vand.u32 %v2059, 4294901760
    %2061 = vmatmul.f32.gmra.mxu0 %v2060
    %v2062 = vpop.f32.mrf.mxu0
    %v2063 = vadd.f32 %v2021, %v2062
    %v2064 = vand.u32 %v1879, 4294901760
    %v2065 = vsub.f32 %v1879, %v2064
    %v2066 = vand.u32 %v2065, 4294901760
    %2067 = vmatmul.f32.gmra.mxu0 %v2066
    %v2068 = vpop.f32.mrf.mxu0
    %v2069 = vadd.f32 %v2026, %v2068
    %v2070 = vand.u32 %v1882, 4294901760
    %v2071 = vsub.f32 %v1882, %v2070
    %v2072 = vand.u32 %v2071, 4294901760
    %2073 = vmatmul.f32.gmra.mxu0 %v2072
    %v2074 = vpop.f32.mrf.mxu0
    %v2075 = vadd.f32 %v2031, %v2074
    %v2076 = vand.u32 %v1885, 4294901760
    %v2077 = vsub.f32 %v1885, %v2076
    %v2078 = vand.u32 %v2077, 4294901760
    %2079 = vmatmul.f32.gmra.mxu0 %v2078
    %v2080 = vpop.f32.mrf.mxu0
    %v2081 = vadd.f32 %v2036, %v2080
    %2082 = vdwg.mxu0
    %2083 = vmatpush.msra.mxu0 0.0
    %2084 = vmatpush.msra.mxu0 0.0
    %2085 = vmatpush.msra.mxu0 0.0
    %2086 = vmatpush.msra.mxu0 0.0
    %2087 = vmatpush.msra.mxu0 0.0
    %2088 = vmatpush.msra.mxu0 0.0
    %2089 = vmatpush.msra.mxu0 0.0
    %2090 = vmatpush.msra.mxu0 0.0
    %2091 = vmatpush.msra.mxu0 0.0
    %2092 = vmatpush.msra.mxu0 0.0
    %2093 = vmatpush.msra.mxu0 0.0
    %2094 = vmatpush.msra.mxu0 0.0
    %v2095 = vand.u32 %v1000, 4294901760
    %v2096 = vsub.f32 %v1000, %v2095
    %v2097 = vand.u32 %v2096, 4294901760
    %2098 = vmatpush.msra.mxu0 %v2097
    %v2099 = vand.u32 %v996, 4294901760
    %v2100 = vsub.f32 %v996, %v2099
    %v2101 = vand.u32 %v2100, 4294901760
    %2102 = vmatpush.msra.mxu0 %v2101
    %v2103 = vand.u32 %v992, 4294901760
    %v2104 = vsub.f32 %v992, %v2103
    %v2105 = vand.u32 %v2104, 4294901760
    %2106 = vmatpush.msra.mxu0 %v2105
    %v2107 = vand.u32 %v988, 4294901760
    %v2108 = vsub.f32 %v988, %v2107
    %v2109 = vand.u32 %v2108, 4294901760
    %2110 = vmatpush.msra.mxu0 %v2109
    %v2111 = vand.u32 %v1876, 4294901760
    %2112 = vmatmul.f32.gmra.mxu0 %v2111
    %v2113 = vpop.f32.mrf.mxu0
    %v2114 = vadd.f32 %v2063, %v2113
    %v2115 = vand.u32 %v1879, 4294901760
    %2116 = vmatmul.f32.gmra.mxu0 %v2115
    %v2117 = vpop.f32.mrf.mxu0
    %v2118 = vadd.f32 %v2069, %v2117
    %v2119 = vand.u32 %v1882, 4294901760
    %2120 = vmatmul.f32.gmra.mxu0 %v2119
    %v2121 = vpop.f32.mrf.mxu0
    %v2122 = vadd.f32 %v2075, %v2121
    %v2123 = vand.u32 %v1885, 4294901760
    %2124 = vmatmul.f32.gmra.mxu0 %v2123
    %v2125 = vpop.f32.mrf.mxu0
    %v2126 = vadd.f32 %v2081, %v2125
    %2127 = vdwg.mxu0
    %2128 = vmatpush.msra.mxu0 0.0
    %2129 = vmatpush.msra.mxu0 0.0
    %2130 = vmatpush.msra.mxu0 0.0
    %2131 = vmatpush.msra.mxu0 0.0
    %2132 = vmatpush.msra.mxu0 0.0
    %2133 = vmatpush.msra.mxu0 0.0
    %2134 = vmatpush.msra.mxu0 0.0
    %2135 = vmatpush.msra.mxu0 0.0
    %2136 = vmatpush.msra.mxu0 0.0
    %2137 = vmatpush.msra.mxu0 0.0
    %2138 = vmatpush.msra.mxu0 0.0
    %2139 = vmatpush.msra.mxu0 0.0
    %v2140 = vand.u32 %v1000, 4294901760
    %2141 = vmatpush.msra.mxu0 %v2140
    %v2142 = vand.u32 %v996, 4294901760
    %2143 = vmatpush.msra.mxu0 %v2142
    %v2144 = vand.u32 %v992, 4294901760
    %2145 = vmatpush.msra.mxu0 %v2144
    %v2146 = vand.u32 %v988, 4294901760
    %2147 = vmatpush.msra.mxu0 %v2146
    %v2148 = vand.u32 %v1876, 4294901760
    %2149 = vmatmul.f32.gmra.mxu0 %v2148
    %v2150 = vpop.f32.mrf.mxu0
    %v2151 = vadd.f32 %v2114, %v2150
    %v2152 = vand.u32 %v1879, 4294901760
    %2153 = vmatmul.f32.gmra.mxu0 %v2152
    %v2154 = vpop.f32.mrf.mxu0
    %v2155 = vadd.f32 %v2118, %v2154
    %v2156 = vand.u32 %v1882, 4294901760
    %2157 = vmatmul.f32.gmra.mxu0 %v2156
    %v2158 = vpop.f32.mrf.mxu0
    %v2159 = vadd.f32 %v2122, %v2158
    %v2160 = vand.u32 %v1885, 4294901760
    %2161 = vmatmul.f32.gmra.mxu0 %v2160
    %v2162 = vpop.f32.mrf.mxu0
    %v2163 = vadd.f32 %v2126, %v2162
    %2164 = vdwg.mxu0
    %2165 = vmatpush.msra.mxu0 0.0
    %2166 = vmatpush.msra.mxu0 0.0
    %2167 = vmatpush.msra.mxu0 0.0
    %2168 = vmatpush.msra.mxu0 0.0
    %2169 = vmatpush.msra.mxu0 0.0
    %2170 = vmatpush.msra.mxu0 0.0
    %2171 = vmatpush.msra.mxu0 0.0
    %2172 = vmatpush.msra.mxu0 0.0
    %2173 = vmatpush.msra.mxu0 0.0
    %2174 = vmatpush.msra.mxu0 0.0
    %2175 = vmatpush.msra.mxu0 0.0
    %2176 = vmatpush.msra.mxu0 0.0
    %v2177 = vand.u32 %v1868, 4294901760
    %2178 = vmatpush.msra.mxu0 %v2177
    %v2179 = vand.u32 %v1864, 4294901760
    %2180 = vmatpush.msra.mxu0 %v2179
    %v2181 = vand.u32 %v1860, 4294901760
    %2182 = vmatpush.msra.mxu0 %v2181
    %v2183 = vand.u32 %v1856, 4294901760
    %2184 = vmatpush.msra.mxu0 %v2183
    %v2185 = vand.u32 %v1876, 4294901760
    %v2186 = vsub.f32 %v1876, %v2185
    %v2187 = vand.u32 %v2186, 4294901760
    %v2188 = vsub.f32 %v2186, %v2187
    %v2189 = vand.u32 %v2188, 4294901760
    %2190 = vmatmul.f32.gmra.mxu0 %v2189
    %v2191 = vpop.f32.mrf.mxu0
    %v2192 = vadd.f32 0.0, %v2191
    %v2193 = vand.u32 %v1879, 4294901760
    %v2194 = vsub.f32 %v1879, %v2193
    %v2195 = vand.u32 %v2194, 4294901760
    %v2196 = vsub.f32 %v2194, %v2195
    %v2197 = vand.u32 %v2196, 4294901760
    %2198 = vmatmul.f32.gmra.mxu0 %v2197
    %v2199 = vpop.f32.mrf.mxu0
    %v2200 = vadd.f32 0.0, %v2199
    %v2201 = vand.u32 %v1882, 4294901760
    %v2202 = vsub.f32 %v1882, %v2201
    %v2203 = vand.u32 %v2202, 4294901760
    %v2204 = vsub.f32 %v2202, %v2203
    %v2205 = vand.u32 %v2204, 4294901760
    %2206 = vmatmul.f32.gmra.mxu0 %v2205
    %v2207 = vpop.f32.mrf.mxu0
    %v2208 = vadd.f32 0.0, %v2207
    %v2209 = vand.u32 %v1885, 4294901760
    %v2210 = vsub.f32 %v1885, %v2209
    %v2211 = vand.u32 %v2210, 4294901760
    %v2212 = vsub.f32 %v2210, %v2211
    %v2213 = vand.u32 %v2212, 4294901760
    %2214 = vmatmul.f32.gmra.mxu0 %v2213
    %v2215 = vpop.f32.mrf.mxu0
    %v2216 = vadd.f32 0.0, %v2215
    %2217 = vdwg.mxu0
    %2218 = vmatpush.msra.mxu0 0.0
    %2219 = vmatpush.msra.mxu0 0.0
    %2220 = vmatpush.msra.mxu0 0.0
    %2221 = vmatpush.msra.mxu0 0.0
    %2222 = vmatpush.msra.mxu0 0.0
    %2223 = vmatpush.msra.mxu0 0.0
    %2224 = vmatpush.msra.mxu0 0.0
    %2225 = vmatpush.msra.mxu0 0.0
    %2226 = vmatpush.msra.mxu0 0.0
    %2227 = vmatpush.msra.mxu0 0.0
    %2228 = vmatpush.msra.mxu0 0.0
    %2229 = vmatpush.msra.mxu0 0.0
    %v2230 = vand.u32 %v1868, 4294901760
    %v2231 = vsub.f32 %v1868, %v2230
    %v2232 = vand.u32 %v2231, 4294901760
    %v2233 = vsub.f32 %v2231, %v2232
    %v2234 = vand.u32 %v2233, 4294901760
    %2235 = vmatpush.msra.mxu0 %v2234
    %v2236 = vand.u32 %v1864, 4294901760
    %v2237 = vsub.f32 %v1864, %v2236
    %v2238 = vand.u32 %v2237, 4294901760
    %v2239 = vsub.f32 %v2237, %v2238
    %v2240 = vand.u32 %v2239, 4294901760
    %2241 = vmatpush.msra.mxu0 %v2240
    %v2242 = vand.u32 %v1860, 4294901760
    %v2243 = vsub.f32 %v1860, %v2242
    %v2244 = vand.u32 %v2243, 4294901760
    %v2245 = vsub.f32 %v2243, %v2244
    %v2246 = vand.u32 %v2245, 4294901760
    %2247 = vmatpush.msra.mxu0 %v2246
    %v2248 = vand.u32 %v1856, 4294901760
    %v2249 = vsub.f32 %v1856, %v2248
    %v2250 = vand.u32 %v2249, 4294901760
    %v2251 = vsub.f32 %v2249, %v2250
    %v2252 = vand.u32 %v2251, 4294901760
    %2253 = vmatpush.msra.mxu0 %v2252
    %v2254 = vand.u32 %v1876, 4294901760
    %2255 = vmatmul.f32.gmra.mxu0 %v2254
    %v2256 = vpop.f32.mrf.mxu0
    %v2257 = vadd.f32 %v2192, %v2256
    %v2258 = vand.u32 %v1879, 4294901760
    %2259 = vmatmul.f32.gmra.mxu0 %v2258
    %v2260 = vpop.f32.mrf.mxu0
    %v2261 = vadd.f32 %v2200, %v2260
    %v2262 = vand.u32 %v1882, 4294901760
    %2263 = vmatmul.f32.gmra.mxu0 %v2262
    %v2264 = vpop.f32.mrf.mxu0
    %v2265 = vadd.f32 %v2208, %v2264
    %v2266 = vand.u32 %v1885, 4294901760
    %2267 = vmatmul.f32.gmra.mxu0 %v2266
    %v2268 = vpop.f32.mrf.mxu0
    %v2269 = vadd.f32 %v2216, %v2268
    %2270 = vdwg.mxu0
    %2271 = vmatpush.msra.mxu0 0.0
    %2272 = vmatpush.msra.mxu0 0.0
    %2273 = vmatpush.msra.mxu0 0.0
    %2274 = vmatpush.msra.mxu0 0.0
    %2275 = vmatpush.msra.mxu0 0.0
    %2276 = vmatpush.msra.mxu0 0.0
    %2277 = vmatpush.msra.mxu0 0.0
    %2278 = vmatpush.msra.mxu0 0.0
    %2279 = vmatpush.msra.mxu0 0.0
    %2280 = vmatpush.msra.mxu0 0.0
    %2281 = vmatpush.msra.mxu0 0.0
    %2282 = vmatpush.msra.mxu0 0.0
    %v2283 = vand.u32 %v1868, 4294901760
    %v2284 = vsub.f32 %v1868, %v2283
    %2285 = vmatpush.msra.mxu0 %v2284
    %v2286 = vand.u32 %v1864, 4294901760
    %v2287 = vsub.f32 %v1864, %v2286
    %2288 = vmatpush.msra.mxu0 %v2287
    %v2289 = vand.u32 %v1860, 4294901760
    %v2290 = vsub.f32 %v1860, %v2289
    %2291 = vmatpush.msra.mxu0 %v2290
    %v2292 = vand.u32 %v1856, 4294901760
    %v2293 = vsub.f32 %v1856, %v2292
    %2294 = vmatpush.msra.mxu0 %v2293
    %v2295 = vand.u32 %v1876, 4294901760
    %v2296 = vsub.f32 %v1876, %v2295
    %2297 = vmatmul.f32.gmra.mxu0 %v2296
    %v2298 = vpop.f32.mrf.mxu0
    %v2299 = vadd.f32 %v2257, %v2298
    %v2300 = vand.u32 %v1879, 4294901760
    %v2301 = vsub.f32 %v1879, %v2300
    %2302 = vmatmul.f32.gmra.mxu0 %v2301
    %v2303 = vpop.f32.mrf.mxu0
    %v2304 = vadd.f32 %v2261, %v2303
    %v2305 = vand.u32 %v1882, 4294901760
    %v2306 = vsub.f32 %v1882, %v2305
    %2307 = vmatmul.f32.gmra.mxu0 %v2306
    %v2308 = vpop.f32.mrf.mxu0
    %v2309 = vadd.f32 %v2265, %v2308
    %v2310 = vand.u32 %v1885, 4294901760
    %v2311 = vsub.f32 %v1885, %v2310
    %2312 = vmatmul.f32.gmra.mxu0 %v2311
    %v2313 = vpop.f32.mrf.mxu0
    %v2314 = vadd.f32 %v2269, %v2313
    %2315 = vdwg.mxu0
    %2316 = vmatpush.msra.mxu0 0.0
    %2317 = vmatpush.msra.mxu0 0.0
    %2318 = vmatpush.msra.mxu0 0.0
    %2319 = vmatpush.msra.mxu0 0.0
    %2320 = vmatpush.msra.mxu0 0.0
    %2321 = vmatpush.msra.mxu0 0.0
    %2322 = vmatpush.msra.mxu0 0.0
    %2323 = vmatpush.msra.mxu0 0.0
    %2324 = vmatpush.msra.mxu0 0.0
    %2325 = vmatpush.msra.mxu0 0.0
    %2326 = vmatpush.msra.mxu0 0.0
    %2327 = vmatpush.msra.mxu0 0.0
    %v2328 = vand.u32 %v1868, 4294901760
    %2329 = vmatpush.msra.mxu0 %v2328
    %v2330 = vand.u32 %v1864, 4294901760
    %2331 = vmatpush.msra.mxu0 %v2330
    %v2332 = vand.u32 %v1860, 4294901760
    %2333 = vmatpush.msra.mxu0 %v2332
    %v2334 = vand.u32 %v1856, 4294901760
    %2335 = vmatpush.msra.mxu0 %v2334
    %v2336 = vand.u32 %v1876, 4294901760
    %v2337 = vsub.f32 %v1876, %v2336
    %v2338 = vand.u32 %v2337, 4294901760
    %2339 = vmatmul.f32.gmra.mxu0 %v2338
    %v2340 = vpop.f32.mrf.mxu0
    %v2341 = vadd.f32 %v2299, %v2340
    %v2342 = vand.u32 %v1879, 4294901760
    %v2343 = vsub.f32 %v1879, %v2342
    %v2344 = vand.u32 %v2343, 4294901760
    %2345 = vmatmul.f32.gmra.mxu0 %v2344
    %v2346 = vpop.f32.mrf.mxu0
    %v2347 = vadd.f32 %v2304, %v2346
    %v2348 = vand.u32 %v1882, 4294901760
    %v2349 = vsub.f32 %v1882, %v2348
    %v2350 = vand.u32 %v2349, 4294901760
    %2351 = vmatmul.f32.gmra.mxu0 %v2350
    %v2352 = vpop.f32.mrf.mxu0
    %v2353 = vadd.f32 %v2309, %v2352
    %v2354 = vand.u32 %v1885, 4294901760
    %v2355 = vsub.f32 %v1885, %v2354
    %v2356 = vand.u32 %v2355, 4294901760
    %2357 = vmatmul.f32.gmra.mxu0 %v2356
    %v2358 = vpop.f32.mrf.mxu0
    %v2359 = vadd.f32 %v2314, %v2358
    %2360 = vdwg.mxu0
    %2361 = vmatpush.msra.mxu0 0.0
    %2362 = vmatpush.msra.mxu0 0.0
    %2363 = vmatpush.msra.mxu0 0.0
    %2364 = vmatpush.msra.mxu0 0.0
    %2365 = vmatpush.msra.mxu0 0.0
    %2366 = vmatpush.msra.mxu0 0.0
    %2367 = vmatpush.msra.mxu0 0.0
    %2368 = vmatpush.msra.mxu0 0.0
    %2369 = vmatpush.msra.mxu0 0.0
    %2370 = vmatpush.msra.mxu0 0.0
    %2371 = vmatpush.msra.mxu0 0.0
    %2372 = vmatpush.msra.mxu0 0.0
    %v2373 = vand.u32 %v1868, 4294901760
    %v2374 = vsub.f32 %v1868, %v2373
    %v2375 = vand.u32 %v2374, 4294901760
    %2376 = vmatpush.msra.mxu0 %v2375
    %v2377 = vand.u32 %v1864, 4294901760
    %v2378 = vsub.f32 %v1864, %v2377
    %v2379 = vand.u32 %v2378, 4294901760
    %2380 = vmatpush.msra.mxu0 %v2379
    %v2381 = vand.u32 %v1860, 4294901760
    %v2382 = vsub.f32 %v1860, %v2381
    %v2383 = vand.u32 %v2382, 4294901760
    %2384 = vmatpush.msra.mxu0 %v2383
    %v2385 = vand.u32 %v1856, 4294901760
    %v2386 = vsub.f32 %v1856, %v2385
    %v2387 = vand.u32 %v2386, 4294901760
    %2388 = vmatpush.msra.mxu0 %v2387
    %v2389 = vand.u32 %v1876, 4294901760
    %2390 = vmatmul.f32.gmra.mxu0 %v2389
    %v2391 = vpop.f32.mrf.mxu0
    %v2392 = vadd.f32 %v2341, %v2391
    %v2393 = vand.u32 %v1879, 4294901760
    %2394 = vmatmul.f32.gmra.mxu0 %v2393
    %v2395 = vpop.f32.mrf.mxu0
    %v2396 = vadd.f32 %v2347, %v2395
    %v2397 = vand.u32 %v1882, 4294901760
    %2398 = vmatmul.f32.gmra.mxu0 %v2397
    %v2399 = vpop.f32.mrf.mxu0
    %v2400 = vadd.f32 %v2353, %v2399
    %v2401 = vand.u32 %v1885, 4294901760
    %2402 = vmatmul.f32.gmra.mxu0 %v2401
    %v2403 = vpop.f32.mrf.mxu0
    %v2404 = vadd.f32 %v2359, %v2403
    %2405 = vdwg.mxu0
    %2406 = vmatpush.msra.mxu0 0.0
    %2407 = vmatpush.msra.mxu0 0.0
    %2408 = vmatpush.msra.mxu0 0.0
    %2409 = vmatpush.msra.mxu0 0.0
    %2410 = vmatpush.msra.mxu0 0.0
    %2411 = vmatpush.msra.mxu0 0.0
    %2412 = vmatpush.msra.mxu0 0.0
    %2413 = vmatpush.msra.mxu0 0.0
    %2414 = vmatpush.msra.mxu0 0.0
    %2415 = vmatpush.msra.mxu0 0.0
    %2416 = vmatpush.msra.mxu0 0.0
    %2417 = vmatpush.msra.mxu0 0.0
    %v2418 = vand.u32 %v1868, 4294901760
    %2419 = vmatpush.msra.mxu0 %v2418
    %v2420 = vand.u32 %v1864, 4294901760
    %2421 = vmatpush.msra.mxu0 %v2420
    %v2422 = vand.u32 %v1860, 4294901760
    %2423 = vmatpush.msra.mxu0 %v2422
    %v2424 = vand.u32 %v1856, 4294901760
    %2425 = vmatpush.msra.mxu0 %v2424
    %v2426 = vand.u32 %v1876, 4294901760
    %2427 = vmatmul.f32.gmra.mxu0 %v2426
    %v2428 = vpop.f32.mrf.mxu0
    %v2429 = vadd.f32 %v2392, %v2428
    %v2430 = vand.u32 %v1879, 4294901760
    %2431 = vmatmul.f32.gmra.mxu0 %v2430
    %v2432 = vpop.f32.mrf.mxu0
    %v2433 = vadd.f32 %v2396, %v2432
    %v2434 = vand.u32 %v1882, 4294901760
    %2435 = vmatmul.f32.gmra.mxu0 %v2434
    %v2436 = vpop.f32.mrf.mxu0
    %v2437 = vadd.f32 %v2400, %v2436
    %v2438 = vand.u32 %v1885, 4294901760
    %2439 = vmatmul.f32.gmra.mxu0 %v2438
    %v2440 = vpop.f32.mrf.mxu0
    %v2441 = vadd.f32 %v2404, %v2440
    %2442 = vdwg.mxu0
    %2443 = vst [vmem:[#allocation8] sm:$0xff] %v2151
    %2444 = vst [vmem:[#allocation8 + $0x8] sm:$0xff] %v2429
    %2445 = vst [vmem:[#allocation8 + $0x10] sm:$0xff] %v2155
    %2446 = vst [vmem:[#allocation8 + $0x18] sm:$0xff] %v2433
    %2447 = vst [vmem:[#allocation8 + $0x20] sm:$0xff] %v2159
    %2448 = vst [vmem:[#allocation8 + $0x28] sm:$0xff] %v2437
    %2449 = vst [vmem:[#allocation8 + $0x30] sm:$0xff] %v2163
    %2450 = vst [vmem:[#allocation8 + $0x38] sm:$0xff] %v2441
    // Predicated region
    $region26: #{tpu_custom_call.1} parent=1 // pred_check
      _
    $region27: #{tpu_custom_call.1} parent=1 // pred_check_branch
      %2452 = sbr.rel (0) target = $region29
    $region28: #{tpu_custom_call.1} parent=1 // pred_region
      %2454 = vsyncadd [#allocation4], 0
      %s2455 = sshll.u32 [#allocation8], 4
      %s2456 = int_to_ptr.vmem [resolvable:$true] %s2455
      %s2457 = sshll.u32 %s3, 4
      %s2458 = int_to_ptr.hbm [resolvable:$true] %s2457
      %2463 = dma.vmem_to_hbm [thread:$0]  %s2456, 1024, %s2458, [#allocation4], 256, 256, 16
    $region29: #{tpu_custom_call.1} parent=1 // pred_fallthru
      _
    // Predicated region
    $region30: #{tpu_custom_call.1} parent=1 // pred_check
      _
    $region31: #{tpu_custom_call.1} parent=1 // pred_check_branch
      %2465 = sbr.rel (0) target = $region33
    $region32: #{tpu_custom_call.1} parent=1 // pred_region
      %2467 = dma.done [#allocation4], 1024
    $region33: #{tpu_custom_call.1} parent=1 // pred_fallthru
      _
    %2468 = vsyncpa [#allocation3], 1
    %2469 = vsyncpa [#allocation6], 1
    %2470 = vsyncpa [#allocation4], 1

</llo_original>
